<compile_context>
chip_gen: v7x
topology: tpu7x:2x2x1
jax: 0.10.0
libtpu: 0.0.40
codegen_flags: <defaults>
</compile_context>

<pallas_src>
import math

import jax
import jax.numpy as jnp
from jax.experimental import pallas as pl
from jax.experimental.pallas import tpu as pltpu

# Full dimension chain across both sub-MLPs (12 linear layers).
DIM_CHAIN = [256, 128, 64, 32, 16, 8, 8, 8, 16, 32, 64, 128, 256]
N_LAYERS = len(DIM_CHAIN) - 1
# Layers with NO tanh after them: last layer of the encoder and of the decoder.
NO_ACT_LAYERS = (N_LAYERS // 2 - 1, N_LAYERS - 1)

_VMEM_LIMIT_BYTES = 48 * 1024 * 1024   # fits v7x's 64 MiB physical; plenty on v5e/v6e


def _round_up(x, m):
    return ((x + m - 1) // m) * m


def _make_kernel(act_flags):
    """Fused forward: len(act_flags) x (bf16 matmul -> f32 bias [-> f32 tanh])."""
    n = len(act_flags)

    def kernel(x_ref, *refs):
        out_ref = refs[-1]
        wb_refs = refs[:-1]                 # interleaved: w0, b0, w1, b1, ...
        h = x_ref[...]                      # (tb, 256) bf16 (cast in the wrapper)
        for i, has_act in enumerate(act_flags):
            w = wb_refs[2 * i][...]         # (d_in, d_out) bf16, VMEM-resident
            b = wb_refs[2 * i + 1][...]     # (1, d_out) f32 -> broadcasts over batch
            acc = jnp.dot(h, w, preferred_element_type=jnp.float32) + b
            if has_act:
                # Cast AFTER the activation so the inter-layer intermediate that
                # lives in vregs / spills to VMEM is bf16 instead of f32.
                h = jnp.tanh(acc).astype(jnp.bfloat16)
            elif i != n - 1:
                h = acc.astype(jnp.bfloat16)
            else:
                h = acc                     # final layer: keep f32 for the store
        out_ref[...] = h.astype(out_ref.dtype)

    return kernel


def _fuse_linear_pair(params):
    """Fuse the encoder's final linear (no tanh) with the decoder's first linear.

    Both factors are (8, 8), so the fused weight is (8, 8) and the fused bias
    is (1, 8).  Algebraically exact: x @ W5 + b5 then @ W6 + b6  ==  x @ (W5@W6)
    + (b5@W6 + b6).
    """
    params = list(params)
    i = len(params) // 2 - 1                # encoder tail, directly followed by decoder head
    w5, b5 = params[i]
    w6, b6 = params[i + 1]
    wf = w5 @ w6                            # (8, 8)
    bf = b5 @ w6 + b6                       # (1, 8)
    return params[:i] + [(wf, bf)] + params[i + 2:]


def _choose_tile(B, tb):
    """Batch tile: multiple of 16 (bf16 sublane packing); keep grid >= 2 steps
    whenever the batch allows it so the "parallel" axis uses both v7x cores."""
    tb = max(16, _round_up(min(tb, max(B, 1)), 16))
    if B <= tb:
        tb = _round_up(max(1, -(-B // 2)), 16)
    return tb


def mlp_module_8_short(desc, params, *, tb=2048):
    """desc: (B, 256) float32.  params: list of (W (d_in,d_out), b (1,d_out)) f32."""
    B, d_in = desc.shape

    fused = _fuse_linear_pair(params)
    n_layers = len(fused)                   # 11
    # After fusion only the very last layer has no tanh.
    act_flags = tuple(i != n_layers - 1 for i in range(n_layers))
    d_out = fused[-1][0].shape[1]

    # Batch tiling.
    tb = _choose_tile(B, tb)
    b_padded = _round_up(B, tb)
    # Streamed input in bf16: halves HBM->VMEM DMA + input double-buffer; the
    # first layer already consumed a bf16 operand, so no precision change.
    x = desc.astype(jnp.bfloat16)
    if b_padded != B:
        x = jnp.pad(x, ((0, b_padded - B), (0, 0)))
    grid = (b_padded // tb,)

    flat = []
    in_specs = [pl.BlockSpec((tb, d_in), lambda i: (i, 0))]   # streamed input tile
    for w, b in fused:
        wq = w.astype(jnp.bfloat16)         # MXU-native operand, halves resident VMEM
        bq = b.astype(jnp.float32)
        flat.append(wq)
        flat.append(bq)
        # Full-array blocks with a constant index_map -> resident across grid steps.
        in_specs.append(pl.BlockSpec(wq.shape, lambda i: (0, 0)))
        in_specs.append(pl.BlockSpec(bq.shape, lambda i: (0, 0)))

    flops = 2 * b_padded * sum(w.shape[0] * w.shape[1] for w, _ in fused)
    transcendentals = b_padded * sum(
        w.shape[1] for (w, _), a in zip(fused, act_flags) if a)
    bytes_accessed = (b_padded * d_in * 2 + b_padded * d_out * 4
                      + sum(w.shape[0] * w.shape[1] * 2 + w.shape[1] * 4
                            for w, _ in fused))

    out = pl.pallas_call(
        _make_kernel(act_flags),
        out_shape=jax.ShapeDtypeStruct((b_padded, d_out), jnp.float32),
        grid=grid,
        in_specs=in_specs,
        out_specs=pl.BlockSpec((tb, d_out), lambda i: (i, 0)),
        compiler_params=pltpu.CompilerParams(
            dimension_semantics=("parallel",),
            vmem_limit_bytes=_VMEM_LIMIT_BYTES),
        cost_estimate=pl.CostEstimate(
            flops=flops,
            transcendentals=transcendentals,
            bytes_accessed=bytes_accessed),
    )(x, *flat)

    return out[:B]


def init_params(key):
    """Deterministic init mimicking PyTorch nn.Linear default (U(-1/sqrt(fan_in), +))."""
    params = []
    for i in range(N_LAYERS):
        d_in, d_out = DIM_CHAIN[i], DIM_CHAIN[i + 1]
        key, kw, kb = jax.random.split(key, 3)
        bound = 1.0 / math.sqrt(d_in)
        w = jax.random.uniform(kw, (d_in, d_out), jnp.float32, -bound, bound)
        b = jax.random.uniform(kb, (1, d_out), jnp.float32, -bound, bound)
        params.append((w, b))
    return params


def mlp_module_8_short_ref(desc, params):
    """Pure-JAX f32 reference (unfused, matches the PyTorch module exactly)."""
    h = desc
    for i, (w, b) in enumerate(params):
        h = h @ w + b
        if i not in NO_ACT_LAYERS:
            h = jnp.tanh(h)
    return h


if __name__ == "__main__":
    key = jax.random.PRNGKey(0)
    key, k_in = jax.random.split(key)

    batch = 20                              # small, deliberately not a multiple of 16
    desc = jax.random.normal(k_in, (batch, 256), jnp.float32)
    params = init_params(key)

    ref = mlp_module_8_short_ref(desc, params)

    # Default path: tile is halved so the grid has 2 steps (megacore-friendly).
    out = jax.block_until_ready(mlp_module_8_short(desc, params))
    assert out.shape == (batch, 256), out.shape
    # bf16 matmul operands / intermediates with f32 accumulation -> relaxed tolerance.
    assert jnp.allclose(out, ref, atol=5e-2, rtol=5e-2), \
        float(jnp.max(jnp.abs(out - ref)))

    # Also exercise an explicit small tile (2 tiles of 16 rows, with padding).
    out_tiled = jax.block_until_ready(mlp_module_8_short(desc, params, tb=16))
    assert out_tiled.shape == (batch, 256), out_tiled.shape
    assert jnp.allclose(out_tiled, ref, atol=5e-2, rtol=5e-2), \
        float(jnp.max(jnp.abs(out_tiled - ref)))

    print("KERNEL_OK")
</pallas_src>

<mosaic_0001>
module attributes {stable_mosaic.version = 11 : i64} {
  func.func @kernel(%arg0: i32, %arg1: memref<16x256xbf16, #tpu.memory_space<vmem>>, %arg2: memref<256x128xbf16, #tpu.memory_space<vmem>>, %arg3: memref<1x128xf32, #tpu.memory_space<vmem>>, %arg4: memref<128x64xbf16, #tpu.memory_space<vmem>>, %arg5: memref<1x64xf32, #tpu.memory_space<vmem>>, %arg6: memref<64x32xbf16, #tpu.memory_space<vmem>>, %arg7: memref<1x32xf32, #tpu.memory_space<vmem>>, %arg8: memref<32x16xbf16, #tpu.memory_space<vmem>>, %arg9: memref<1x16xf32, #tpu.memory_space<vmem>>, %arg10: memref<16x8xbf16, #tpu.memory_space<vmem>>, %arg11: memref<1x8xf32, #tpu.memory_space<vmem>>, %arg12: memref<8x8xbf16, #tpu.memory_space<vmem>>, %arg13: memref<1x8xf32, #tpu.memory_space<vmem>>, %arg14: memref<8x16xbf16, #tpu.memory_space<vmem>>, %arg15: memref<1x16xf32, #tpu.memory_space<vmem>>, %arg16: memref<16x32xbf16, #tpu.memory_space<vmem>>, %arg17: memref<1x32xf32, #tpu.memory_space<vmem>>, %arg18: memref<32x64xbf16, #tpu.memory_space<vmem>>, %arg19: memref<1x64xf32, #tpu.memory_space<vmem>>, %arg20: memref<64x128xbf16, #tpu.memory_space<vmem>>, %arg21: memref<1x128xf32, #tpu.memory_space<vmem>>, %arg22: memref<128x256xbf16, #tpu.memory_space<vmem>>, %arg23: memref<1x256xf32, #tpu.memory_space<vmem>>, %arg24: memref<16x256xf32, #tpu.memory_space<vmem>>) attributes {dimension_semantics = [#tpu.dimension_semantics<parallel>], iteration_bounds = array<i64: 2>, scalar_prefetch = 0 : i64, scratch_operands = 0 : i64, tpu.core_type = #tpu.core_type<tc>, window_params = [{transform_indices = @transform_0, window_bounds = array<i64: 16, 256>}, {pipeline_mode = #tpu.pipeline_mode<synchronous>, transform_indices = @transform_1, window_bounds = array<i64: 256, 128>}, {pipeline_mode = #tpu.pipeline_mode<synchronous>, transform_indices = @transform_2, window_bounds = array<i64: 1, 128>}, {pipeline_mode = #tpu.pipeline_mode<synchronous>, transform_indices = @transform_3, window_bounds = array<i64: 128, 64>}, {pipeline_mode = #tpu.pipeline_mode<synchronous>, transform_indices = @transform_4, window_bounds = array<i64: 1, 64>}, {pipeline_mode = #tpu.pipeline_mode<synchronous>, transform_indices = @transform_5, window_bounds = array<i64: 64, 32>}, {pipeline_mode = #tpu.pipeline_mode<synchronous>, transform_indices = @transform_6, window_bounds = array<i64: 1, 32>}, {pipeline_mode = #tpu.pipeline_mode<synchronous>, transform_indices = @transform_7, window_bounds = array<i64: 32, 16>}, {pipeline_mode = #tpu.pipeline_mode<synchronous>, transform_indices = @transform_8, window_bounds = array<i64: 1, 16>}, {pipeline_mode = #tpu.pipeline_mode<synchronous>, transform_indices = @transform_9, window_bounds = array<i64: 16, 8>}, {pipeline_mode = #tpu.pipeline_mode<synchronous>, transform_indices = @transform_10, window_bounds = array<i64: 1, 8>}, {pipeline_mode = #tpu.pipeline_mode<synchronous>, transform_indices = @transform_11, window_bounds = array<i64: 8, 8>}, {pipeline_mode = #tpu.pipeline_mode<synchronous>, transform_indices = @transform_12, window_bounds = array<i64: 1, 8>}, {pipeline_mode = #tpu.pipeline_mode<synchronous>, transform_indices = @transform_13, window_bounds = array<i64: 8, 16>}, {pipeline_mode = #tpu.pipeline_mode<synchronous>, transform_indices = @transform_14, window_bounds = array<i64: 1, 16>}, {pipeline_mode = #tpu.pipeline_mode<synchronous>, transform_indices = @transform_15, window_bounds = array<i64: 16, 32>}, {pipeline_mode = #tpu.pipeline_mode<synchronous>, transform_indices = @transform_16, window_bounds = array<i64: 1, 32>}, {pipeline_mode = #tpu.pipeline_mode<synchronous>, transform_indices = @transform_17, window_bounds = array<i64: 32, 64>}, {pipeline_mode = #tpu.pipeline_mode<synchronous>, transform_indices = @transform_18, window_bounds = array<i64: 1, 64>}, {pipeline_mode = #tpu.pipeline_mode<synchronous>, transform_indices = @transform_19, window_bounds = array<i64: 64, 128>}, {pipeline_mode = #tpu.pipeline_mode<synchronous>, transform_indices = @transform_20, window_bounds = array<i64: 1, 128>}, {pipeline_mode = #tpu.pipeline_mode<synchronous>, transform_indices = @transform_21, window_bounds = array<i64: 128, 256>}, {pipeline_mode = #tpu.pipeline_mode<synchronous>, transform_indices = @transform_22, window_bounds = array<i64: 1, 256>}, {transform_indices = @transform_23, window_bounds = array<i64: 16, 256>}]} {
    %c0 = arith.constant 0 : index
    %c0_0 = arith.constant 0 : index
    %0 = vector.load %arg1[%c0, %c0_0] : memref<16x256xbf16, #tpu.memory_space<vmem>>, vector<16x256xbf16>
    %c0_1 = arith.constant 0 : index
    %c0_2 = arith.constant 0 : index
    %1 = vector.load %arg2[%c0_1, %c0_2] : memref<256x128xbf16, #tpu.memory_space<vmem>>, vector<256x128xbf16>
    %c0_3 = arith.constant 0 : index
    %c0_4 = arith.constant 0 : index
    %2 = vector.load %arg3[%c0_3, %c0_4] : memref<1x128xf32, #tpu.memory_space<vmem>>, vector<1x128xf32>
    %cst = arith.constant dense<0.000000e+00> : vector<16x128xf32>
    %3 = tpu.matmul %0, %1, %cst {dimension_numbers = #tpu.dot_dimension_numbers<[1], [0], [0], [1], [0, 0, 1, 1], [], []>} : vector<16x256xbf16>, vector<256x128xbf16>, vector<16x128xf32> -> vector<16x128xf32>
    %4 = vector.broadcast %2 : vector<1x128xf32> to vector<16x128xf32>
    %5 = arith.addf %3, %4 : vector<16x128xf32>
    %6 = math.tanh %5 : vector<16x128xf32>
    %7 = arith.truncf %6 : vector<16x128xf32> to vector<16x128xbf16>
    %c0_5 = arith.constant 0 : index
    %c0_6 = arith.constant 0 : index
    %8 = vector.load %arg4[%c0_5, %c0_6] : memref<128x64xbf16, #tpu.memory_space<vmem>>, vector<128x64xbf16>
    %c0_7 = arith.constant 0 : index
    %c0_8 = arith.constant 0 : index
    %9 = vector.load %arg5[%c0_7, %c0_8] : memref<1x64xf32, #tpu.memory_space<vmem>>, vector<1x64xf32>
    %cst_9 = arith.constant dense<0.000000e+00> : vector<16x64xf32>
    %10 = tpu.matmul %7, %8, %cst_9 {dimension_numbers = #tpu.dot_dimension_numbers<[1], [0], [0], [1], [0, 0, 1, 1], [], []>} : vector<16x128xbf16>, vector<128x64xbf16>, vector<16x64xf32> -> vector<16x64xf32>
    %11 = vector.broadcast %9 : vector<1x64xf32> to vector<16x64xf32>
    %12 = arith.addf %10, %11 : vector<16x64xf32>
    %13 = math.tanh %12 : vector<16x64xf32>
    %14 = arith.truncf %13 : vector<16x64xf32> to vector<16x64xbf16>
    %c0_10 = arith.constant 0 : index
    %c0_11 = arith.constant 0 : index
    %15 = vector.load %arg6[%c0_10, %c0_11] : memref<64x32xbf16, #tpu.memory_space<vmem>>, vector<64x32xbf16>
    %c0_12 = arith.constant 0 : index
    %c0_13 = arith.constant 0 : index
    %16 = vector.load %arg7[%c0_12, %c0_13] : memref<1x32xf32, #tpu.memory_space<vmem>>, vector<1x32xf32>
    %cst_14 = arith.constant dense<0.000000e+00> : vector<16x32xf32>
    %17 = tpu.matmul %14, %15, %cst_14 {dimension_numbers = #tpu.dot_dimension_numbers<[1], [0], [0], [1], [0, 0, 1, 1], [], []>} : vector<16x64xbf16>, vector<64x32xbf16>, vector<16x32xf32> -> vector<16x32xf32>
    %18 = vector.broadcast %16 : vector<1x32xf32> to vector<16x32xf32>
    %19 = arith.addf %17, %18 : vector<16x32xf32>
    %20 = math.tanh %19 : vector<16x32xf32>
    %21 = arith.truncf %20 : vector<16x32xf32> to vector<16x32xbf16>
    %c0_15 = arith.constant 0 : index
    %c0_16 = arith.constant 0 : index
    %22 = vector.load %arg8[%c0_15, %c0_16] : memref<32x16xbf16, #tpu.memory_space<vmem>>, vector<32x16xbf16>
    %c0_17 = arith.constant 0 : index
    %c0_18 = arith.constant 0 : index
    %23 = vector.load %arg9[%c0_17, %c0_18] : memref<1x16xf32, #tpu.memory_space<vmem>>, vector<1x16xf32>
    %cst_19 = arith.constant dense<0.000000e+00> : vector<16x16xf32>
    %24 = tpu.matmul %21, %22, %cst_19 {dimension_numbers = #tpu.dot_dimension_numbers<[1], [0], [0], [1], [0, 0, 1, 1], [], []>} : vector<16x32xbf16>, vector<32x16xbf16>, vector<16x16xf32> -> vector<16x16xf32>
    %25 = vector.broadcast %23 : vector<1x16xf32> to vector<16x16xf32>
    %26 = arith.addf %24, %25 : vector<16x16xf32>
    %27 = math.tanh %26 : vector<16x16xf32>
    %28 = arith.truncf %27 : vector<16x16xf32> to vector<16x16xbf16>
    %c0_20 = arith.constant 0 : index
    %c0_21 = arith.constant 0 : index
    %29 = vector.load %arg10[%c0_20, %c0_21] : memref<16x8xbf16, #tpu.memory_space<vmem>>, vector<16x8xbf16>
    %c0_22 = arith.constant 0 : index
    %c0_23 = arith.constant 0 : index
    %30 = vector.load %arg11[%c0_22, %c0_23] : memref<1x8xf32, #tpu.memory_space<vmem>>, vector<1x8xf32>
    %cst_24 = arith.constant dense<0.000000e+00> : vector<16x8xf32>
    %31 = tpu.matmul %28, %29, %cst_24 {dimension_numbers = #tpu.dot_dimension_numbers<[1], [0], [0], [1], [0, 0, 1, 1], [], []>} : vector<16x16xbf16>, vector<16x8xbf16>, vector<16x8xf32> -> vector<16x8xf32>
    %32 = vector.broadcast %30 : vector<1x8xf32> to vector<16x8xf32>
    %33 = arith.addf %31, %32 : vector<16x8xf32>
    %34 = math.tanh %33 : vector<16x8xf32>
    %35 = arith.truncf %34 : vector<16x8xf32> to vector<16x8xbf16>
    %c0_25 = arith.constant 0 : index
    %c0_26 = arith.constant 0 : index
    %36 = vector.load %arg12[%c0_25, %c0_26] : memref<8x8xbf16, #tpu.memory_space<vmem>>, vector<8x8xbf16>
    %c0_27 = arith.constant 0 : index
    %c0_28 = arith.constant 0 : index
    %37 = vector.load %arg13[%c0_27, %c0_28] : memref<1x8xf32, #tpu.memory_space<vmem>>, vector<1x8xf32>
    %cst_29 = arith.constant dense<0.000000e+00> : vector<16x8xf32>
    %38 = tpu.matmul %35, %36, %cst_29 {dimension_numbers = #tpu.dot_dimension_numbers<[1], [0], [0], [1], [0, 0, 1, 1], [], []>} : vector<16x8xbf16>, vector<8x8xbf16>, vector<16x8xf32> -> vector<16x8xf32>
    %39 = vector.broadcast %37 : vector<1x8xf32> to vector<16x8xf32>
    %40 = arith.addf %38, %39 : vector<16x8xf32>
    %41 = math.tanh %40 : vector<16x8xf32>
    %42 = arith.truncf %41 : vector<16x8xf32> to vector<16x8xbf16>
    %c0_30 = arith.constant 0 : index
    %c0_31 = arith.constant 0 : index
    %43 = vector.load %arg14[%c0_30, %c0_31] : memref<8x16xbf16, #tpu.memory_space<vmem>>, vector<8x16xbf16>
    %c0_32 = arith.constant 0 : index
    %c0_33 = arith.constant 0 : index
    %44 = vector.load %arg15[%c0_32, %c0_33] : memref<1x16xf32, #tpu.memory_space<vmem>>, vector<1x16xf32>
    %cst_34 = arith.constant dense<0.000000e+00> : vector<16x16xf32>
    %45 = tpu.matmul %42, %43, %cst_34 {dimension_numbers = #tpu.dot_dimension_numbers<[1], [0], [0], [1], [0, 0, 1, 1], [], []>} : vector<16x8xbf16>, vector<8x16xbf16>, vector<16x16xf32> -> vector<16x16xf32>
    %46 = vector.broadcast %44 : vector<1x16xf32> to vector<16x16xf32>
    %47 = arith.addf %45, %46 : vector<16x16xf32>
    %48 = math.tanh %47 : vector<16x16xf32>
    %49 = arith.truncf %48 : vector<16x16xf32> to vector<16x16xbf16>
    %c0_35 = arith.constant 0 : index
    %c0_36 = arith.constant 0 : index
    %50 = vector.load %arg16[%c0_35, %c0_36] : memref<16x32xbf16, #tpu.memory_space<vmem>>, vector<16x32xbf16>
    %c0_37 = arith.constant 0 : index
    %c0_38 = arith.constant 0 : index
    %51 = vector.load %arg17[%c0_37, %c0_38] : memref<1x32xf32, #tpu.memory_space<vmem>>, vector<1x32xf32>
    %cst_39 = arith.constant dense<0.000000e+00> : vector<16x32xf32>
    %52 = tpu.matmul %49, %50, %cst_39 {dimension_numbers = #tpu.dot_dimension_numbers<[1], [0], [0], [1], [0, 0, 1, 1], [], []>} : vector<16x16xbf16>, vector<16x32xbf16>, vector<16x32xf32> -> vector<16x32xf32>
    %53 = vector.broadcast %51 : vector<1x32xf32> to vector<16x32xf32>
    %54 = arith.addf %52, %53 : vector<16x32xf32>
    %55 = math.tanh %54 : vector<16x32xf32>
    %56 = arith.truncf %55 : vector<16x32xf32> to vector<16x32xbf16>
    %c0_40 = arith.constant 0 : index
    %c0_41 = arith.constant 0 : index
    %57 = vector.load %arg18[%c0_40, %c0_41] : memref<32x64xbf16, #tpu.memory_space<vmem>>, vector<32x64xbf16>
    %c0_42 = arith.constant 0 : index
    %c0_43 = arith.constant 0 : index
    %58 = vector.load %arg19[%c0_42, %c0_43] : memref<1x64xf32, #tpu.memory_space<vmem>>, vector<1x64xf32>
    %cst_44 = arith.constant dense<0.000000e+00> : vector<16x64xf32>
    %59 = tpu.matmul %56, %57, %cst_44 {dimension_numbers = #tpu.dot_dimension_numbers<[1], [0], [0], [1], [0, 0, 1, 1], [], []>} : vector<16x32xbf16>, vector<32x64xbf16>, vector<16x64xf32> -> vector<16x64xf32>
    %60 = vector.broadcast %58 : vector<1x64xf32> to vector<16x64xf32>
    %61 = arith.addf %59, %60 : vector<16x64xf32>
    %62 = math.tanh %61 : vector<16x64xf32>
    %63 = arith.truncf %62 : vector<16x64xf32> to vector<16x64xbf16>
    %c0_45 = arith.constant 0 : index
    %c0_46 = arith.constant 0 : index
    %64 = vector.load %arg20[%c0_45, %c0_46] : memref<64x128xbf16, #tpu.memory_space<vmem>>, vector<64x128xbf16>
    %c0_47 = arith.constant 0 : index
    %c0_48 = arith.constant 0 : index
    %65 = vector.load %arg21[%c0_47, %c0_48] : memref<1x128xf32, #tpu.memory_space<vmem>>, vector<1x128xf32>
    %cst_49 = arith.constant dense<0.000000e+00> : vector<16x128xf32>
    %66 = tpu.matmul %63, %64, %cst_49 {dimension_numbers = #tpu.dot_dimension_numbers<[1], [0], [0], [1], [0, 0, 1, 1], [], []>} : vector<16x64xbf16>, vector<64x128xbf16>, vector<16x128xf32> -> vector<16x128xf32>
    %67 = vector.broadcast %65 : vector<1x128xf32> to vector<16x128xf32>
    %68 = arith.addf %66, %67 : vector<16x128xf32>
    %69 = math.tanh %68 : vector<16x128xf32>
    %70 = arith.truncf %69 : vector<16x128xf32> to vector<16x128xbf16>
    %c0_50 = arith.constant 0 : index
    %c0_51 = arith.constant 0 : index
    %71 = vector.load %arg22[%c0_50, %c0_51] : memref<128x256xbf16, #tpu.memory_space<vmem>>, vector<128x256xbf16>
    %c0_52 = arith.constant 0 : index
    %c0_53 = arith.constant 0 : index
    %72 = vector.load %arg23[%c0_52, %c0_53] : memref<1x256xf32, #tpu.memory_space<vmem>>, vector<1x256xf32>
    %cst_54 = arith.constant dense<0.000000e+00> : vector<16x256xf32>
    %73 = tpu.matmul %70, %71, %cst_54 {dimension_numbers = #tpu.dot_dimension_numbers<[1], [0], [0], [1], [0, 0, 1, 1], [], []>} : vector<16x128xbf16>, vector<128x256xbf16>, vector<16x256xf32> -> vector<16x256xf32>
    %74 = vector.broadcast %72 : vector<1x256xf32> to vector<16x256xf32>
    %75 = arith.addf %73, %74 : vector<16x256xf32>
    %c0_55 = arith.constant 0 : index
    %c0_56 = arith.constant 0 : index
    %76 = vector.load %arg24[%c0_55, %c0_56] : memref<16x256xf32, #tpu.memory_space<vmem>>, vector<16x256xf32>
    tpu.vector_store %arg24[%c0_55, %c0_56], %75 {strides = array<i32>} : memref<16x256xf32, #tpu.memory_space<vmem>>, vector<16x256xf32>,
    return
  }
  func.func @transform_0(%arg0: i32) -> (i32, i32) {
    %c0_i32 = arith.constant 0 : i32
    %c0_i32_0 = arith.constant 0 : i32
    return %arg0, %c0_i32 : i32, i32
  }
  func.func @transform_1(%arg0: i32) -> (i32, i32) {
    %c0_i32 = arith.constant 0 : i32
    %c0_i32_0 = arith.constant 0 : i32
    %c0_i32_1 = arith.constant 0 : i32
    return %c0_i32, %c0_i32_0 : i32, i32
  }
  func.func @transform_2(%arg0: i32) -> (i32, i32) {
    %c0_i32 = arith.constant 0 : i32
    %c0_i32_0 = arith.constant 0 : i32
    %c0_i32_1 = arith.constant 0 : i32
    return %c0_i32, %c0_i32_0 : i32, i32
  }
  func.func @transform_3(%arg0: i32) -> (i32, i32) {
    %c0_i32 = arith.constant 0 : i32
    %c0_i32_0 = arith.constant 0 : i32
    %c0_i32_1 = arith.constant 0 : i32
    return %c0_i32, %c0_i32_0 : i32, i32
  }
  func.func @transform_4(%arg0: i32) -> (i32, i32) {
    %c0_i32 = arith.constant 0 : i32
    %c0_i32_0 = arith.constant 0 : i32
    %c0_i32_1 = arith.constant 0 : i32
    return %c0_i32, %c0_i32_0 : i32, i32
  }
  func.func @transform_5(%arg0: i32) -> (i32, i32) {
    %c0_i32 = arith.constant 0 : i32
    %c0_i32_0 = arith.constant 0 : i32
    %c0_i32_1 = arith.constant 0 : i32
    return %c0_i32, %c0_i32_0 : i32, i32
  }
  func.func @transform_6(%arg0: i32) -> (i32, i32) {
    %c0_i32 = arith.constant 0 : i32
    %c0_i32_0 = arith.constant 0 : i32
    %c0_i32_1 = arith.constant 0 : i32
    return %c0_i32, %c0_i32_0 : i32, i32
  }
  func.func @transform_7(%arg0: i32) -> (i32, i32) {
    %c0_i32 = arith.constant 0 : i32
    %c0_i32_0 = arith.constant 0 : i32
    %c0_i32_1 = arith.constant 0 : i32
    return %c0_i32, %c0_i32_0 : i32, i32
  }
  func.func @transform_8(%arg0: i32) -> (i32, i32) {
    %c0_i32 = arith.constant 0 : i32
    %c0_i32_0 = arith.constant 0 : i32
    %c0_i32_1 = arith.constant 0 : i32
    return %c0_i32, %c0_i32_0 : i32, i32
  }
  func.func @transform_9(%arg0: i32) -> (i32, i32) {
    %c0_i32 = arith.constant 0 : i32
    %c0_i32_0 = arith.constant 0 : i32
    %c0_i32_1 = arith.constant 0 : i32
    return %c0_i32, %c0_i32_0 : i32, i32
  }
  func.func @transform_10(%arg0: i32) -> (i32, i32) {
    %c0_i32 = arith.constant 0 : i32
    %c0_i32_0 = arith.constant 0 : i32
    %c0_i32_1 = arith.constant 0 : i32
    return %c0_i32, %c0_i32_0 : i32, i32
  }
  func.func @transform_11(%arg0: i32) -> (i32, i32) {
    %c0_i32 = arith.constant 0 : i32
    %c0_i32_0 = arith.constant 0 : i32
    %c0_i32_1 = arith.constant 0 : i32
    return %c0_i32, %c0_i32_0 : i32, i32
  }
  func.func @transform_12(%arg0: i32) -> (i32, i32) {
    %c0_i32 = arith.constant 0 : i32
    %c0_i32_0 = arith.constant 0 : i32
    %c0_i32_1 = arith.constant 0 : i32
    return %c0_i32, %c0_i32_0 : i32, i32
  }
  func.func @transform_13(%arg0: i32) -> (i32, i32) {
    %c0_i32 = arith.constant 0 : i32
    %c0_i32_0 = arith.constant 0 : i32
    %c0_i32_1 = arith.constant 0 : i32
    return %c0_i32, %c0_i32_0 : i32, i32
  }
  func.func @transform_14(%arg0: i32) -> (i32, i32) {
    %c0_i32 = arith.constant 0 : i32
    %c0_i32_0 = arith.constant 0 : i32
    %c0_i32_1 = arith.constant 0 : i32
    return %c0_i32, %c0_i32_0 : i32, i32
  }
  func.func @transform_15(%arg0: i32) -> (i32, i32) {
    %c0_i32 = arith.constant 0 : i32
    %c0_i32_0 = arith.constant 0 : i32
    %c0_i32_1 = arith.constant 0 : i32
    return %c0_i32, %c0_i32_0 : i32, i32
  }
  func.func @transform_16(%arg0: i32) -> (i32, i32) {
    %c0_i32 = arith.constant 0 : i32
    %c0_i32_0 = arith.constant 0 : i32
    %c0_i32_1 = arith.constant 0 : i32
    return %c0_i32, %c0_i32_0 : i32, i32
  }
  func.func @transform_17(%arg0: i32) -> (i32, i32) {
    %c0_i32 = arith.constant 0 : i32
    %c0_i32_0 = arith.constant 0 : i32
    %c0_i32_1 = arith.constant 0 : i32
    return %c0_i32, %c0_i32_0 : i32, i32
  }
  func.func @transform_18(%arg0: i32) -> (i32, i32) {
    %c0_i32 = arith.constant 0 : i32
    %c0_i32_0 = arith.constant 0 : i32
    %c0_i32_1 = arith.constant 0 : i32
    return %c0_i32, %c0_i32_0 : i32, i32
  }
  func.func @transform_19(%arg0: i32) -> (i32, i32) {
    %c0_i32 = arith.constant 0 : i32
    %c0_i32_0 = arith.constant 0 : i32
    %c0_i32_1 = arith.constant 0 : i32
    return %c0_i32, %c0_i32_0 : i32, i32
  }
  func.func @transform_20(%arg0: i32) -> (i32, i32) {
    %c0_i32 = arith.constant 0 : i32
    %c0_i32_0 = arith.constant 0 : i32
    %c0_i32_1 = arith.constant 0 : i32
    return %c0_i32, %c0_i32_0 : i32, i32
  }
  func.func @transform_21(%arg0: i32) -> (i32, i32) {
    %c0_i32 = arith.constant 0 : i32
    %c0_i32_0 = arith.constant 0 : i32
    %c0_i32_1 = arith.constant 0 : i32
    return %c0_i32, %c0_i32_0 : i32, i32
  }
  func.func @transform_22(%arg0: i32) -> (i32, i32) {
    %c0_i32 = arith.constant 0 : i32
    %c0_i32_0 = arith.constant 0 : i32
    %c0_i32_1 = arith.constant 0 : i32
    return %c0_i32, %c0_i32_0 : i32, i32
  }
  func.func @transform_23(%arg0: i32) -> (i32, i32) {
    %c0_i32 = arith.constant 0 : i32
    %c0_i32_0 = arith.constant 0 : i32
    return %arg0, %c0_i32 : i32, i32
  }
}

</mosaic_0001>

<llo_original>
// kernel: tpu_custom_call.1
$region0: #{tpu_custom_call.1}
  #allocation0 [shape = 'u32[]', space=smem, size = 0x4, offset = 0x4, fixed_abs, tag = 'smem constant byte address 0x4 - core index']
  #allocation1 [shape = 'u32[144,128]{1,0:T(1,128)}', space=vmem, size = 0x12000, scoped, tag = 'internal scratch']
  %s0 = inlined_call_operand.hbm [shape: bf16[32,256], index: 0, kind: input, shape index: {}]
  %s1 = inlined_call_operand.vmem [shape: bf16[256,128], index: 1, kind: input, shape index: {}]
  %s2 = inlined_call_operand.vmem [shape: f32[1,128], index: 2, kind: input, shape index: {}]
  %s3 = inlined_call_operand.vmem [shape: bf16[128,64], index: 3, kind: input, shape index: {}]
  %s4 = inlined_call_operand.hbm [shape: f32[1,64], index: 4, kind: input, shape index: {}]
  %s5 = inlined_call_operand.vmem [shape: bf16[64,32], index: 5, kind: input, shape index: {}]
  %s6 = inlined_call_operand.hbm [shape: f32[1,32], index: 6, kind: input, shape index: {}]
  %s7 = inlined_call_operand.vmem [shape: bf16[32,16], index: 7, kind: input, shape index: {}]
  %s8 = inlined_call_operand.hbm [shape: f32[1,16], index: 8, kind: input, shape index: {}]
  %s9 = inlined_call_operand.vmem [shape: bf16[16,8], index: 9, kind: input, shape index: {}]
  %s10 = inlined_call_operand.hbm [shape: f32[1,8], index: 10, kind: input, shape index: {}]
  %s11 = inlined_call_operand.hbm [shape: bf16[8,8], index: 11, kind: input, shape index: {}]
  %s12 = inlined_call_operand.hbm [shape: f32[1,8], index: 12, kind: input, shape index: {}]
  %s13 = inlined_call_operand.hbm [shape: bf16[8,16], index: 13, kind: input, shape index: {}]
  %s14 = inlined_call_operand.hbm [shape: f32[1,16], index: 14, kind: input, shape index: {}]
  %s15 = inlined_call_operand.hbm [shape: bf16[16,32], index: 15, kind: input, shape index: {}]
  %s16 = inlined_call_operand.hbm [shape: f32[1,32], index: 16, kind: input, shape index: {}]
  %s17 = inlined_call_operand.hbm [shape: bf16[32,64], index: 17, kind: input, shape index: {}]
  %s18 = inlined_call_operand.hbm [shape: f32[1,64], index: 18, kind: input, shape index: {}]
  %s19 = inlined_call_operand.hbm [shape: bf16[64,128], index: 19, kind: input, shape index: {}]
  %s20 = inlined_call_operand.hbm [shape: f32[1,128], index: 20, kind: input, shape index: {}]
  %s21 = inlined_call_operand.vmem [shape: bf16[128,256], index: 21, kind: input, shape index: {}]
  %s22 = inlined_call_operand.vmem [shape: f32[1,256], index: 22, kind: input, shape index: {}]
  %s23 = inlined_call_operand.hbm [shape: f32[32,256], index: 23, kind: output, shape index: {}]
  %s24 = sld [smem:[#allocation0]]
  $region185: #{tpu_custom_call.1} parent=0
    _
  %s26 = ssub.s32 1, %s24
  %s27 = scalar_select 0, %s26, %s24
  $region1: #{tpu_custom_call.1} parent=0
    #allocation2 [shape = 'u8[16384]{0}', space=vmem, size = 0x4000, scoped, tag = 'input window, operand 0']
    #allocation3 [shape = 's32[2]{0}', space=sflag, size = 0x8, scoped, tag = 'scoped memory for tpu_custom_call.1']
    #allocation4 [shape = 's32[2]{0}', space=sflag, size = 0x8, scoped, tag = 'scoped memory for tpu_custom_call.1']
    #allocation5 [shape = 'u8[512]{0}', space=vmem, size = 0x400, scoped, tag = 'input window, operand 4, single buffered']
    #allocation6 [shape = 's32[1]{0}', space=sflag, size = 0x4, scoped, tag = 'scoped memory for tpu_custom_call.1']
    #allocation7 [shape = 'u8[512]{0}', space=vmem, size = 0x400, scoped, tag = 'input window, operand 6, single buffered']
    #allocation8 [shape = 'u8[512]{0}', space=vmem, size = 0x400, scoped, tag = 'input window, operand 8, single buffered']
    #allocation9 [shape = 's32[1]{0}', space=sflag, size = 0x4, scoped, tag = 'scoped memory for tpu_custom_call.1']
    #allocation10 [shape = 'u8[512]{0}', space=vmem, size = 0x400, scoped, tag = 'input window, operand 10, single buffered']
    #allocation11 [shape = 'u8[2048]{0}', space=vmem, size = 0x800, scoped, tag = 'input window, operand 11, single buffered']
    #allocation12 [shape = 's32[1]{0}', space=sflag, size = 0x4, scoped, tag = 'scoped memory for tpu_custom_call.1']
    #allocation13 [shape = 'u8[512]{0}', space=vmem, size = 0x400, scoped, tag = 'input window, operand 12, single buffered']
    #allocation14 [shape = 'u8[2048]{0}', space=vmem, size = 0x800, scoped, tag = 'input window, operand 13, single buffered']
    #allocation15 [shape = 's32[1]{0}', space=sflag, size = 0x4, scoped, tag = 'scoped memory for tpu_custom_call.1']
    #allocation16 [shape = 'u8[512]{0}', space=vmem, size = 0x400, scoped, tag = 'input window, operand 14, single buffered']
    #allocation17 [shape = 'u8[4096]{0}', space=vmem, size = 0x1000, scoped, tag = 'input window, operand 15, single buffered']
    #allocation18 [shape = 's32[1]{0}', space=sflag, size = 0x4, scoped, tag = 'scoped memory for tpu_custom_call.1']
    #allocation19 [shape = 'u8[512]{0}', space=vmem, size = 0x400, scoped, tag = 'input window, operand 16, single buffered']
    #allocation20 [shape = 'u8[8192]{0}', space=vmem, size = 0x2000, scoped, tag = 'input window, operand 17, single buffered']
    #allocation21 [shape = 's32[1]{0}', space=sflag, size = 0x4, scoped, tag = 'scoped memory for tpu_custom_call.1']
    #allocation22 [shape = 'u8[512]{0}', space=vmem, size = 0x400, scoped, tag = 'input window, operand 18, single buffered']
    #allocation23 [shape = 'u8[16384]{0}', space=vmem, size = 0x4000, scoped, tag = 'input window, operand 19, single buffered']
    #allocation24 [shape = 's32[1]{0}', space=sflag, size = 0x4, scoped, tag = 'scoped memory for tpu_custom_call.1']
    #allocation25 [shape = 'u8[512]{0}', space=vmem, size = 0x400, scoped, tag = 'input window, operand 20, single buffered']
    #allocation26 [shape = 'u8[32768]{0}', space=vmem, size = 0x8000, scoped, tag = 'output window, operand 0']
    %28 = vsyncpa [#allocation3], 0
    %s29 = scalar_lea.sflag [#allocation3], 1
    %30 = vsyncpa %s29, 0
    %31 = vsyncpa [#allocation6], 0
    %32 = vsyncpa [#allocation9], 0
    %33 = vsyncpa [#allocation12], 0
    %34 = vsyncpa [#allocation15], 0
    %35 = vsyncpa [#allocation18], 0
    %36 = vsyncpa [#allocation21], 0
    %37 = vsyncpa [#allocation24], 0
    %38 = vsyncpa [#allocation4], 0
    %s39 = scalar_lea.sflag [#allocation4], 1
    %40 = vsyncpa %s39, 0
    loop: start=0, step=1, limit=4
    $region2: #{tpu_custom_call.1} parent=1 // loop_pre_header
      _
    $region3: #{tpu_custom_call.1} parent=1 // loop_header
      %s42 = sphi 0, %s46
      %p43 = scmp.ge.s32.totalorder %s42, 4
      %s52 = sphi 0, %s54
      %s55 = sphi 0, %s52
      %s56 = sphi 0, %s55
      %s72 = sphi 0, %s56
      %s76 = sphi 0, %s76
      %s78 = sphi 0, %s76
      %s79 = sphi 0, %s78
      %s93 = sphi 0, %s79
      %s97 = sphi 0, %s97
      %s99 = sphi 0, %s97
      %s100 = sphi 0, %s99
      %s114 = sphi 0, %s100
      %s118 = sphi 0, %s118
      %s120 = sphi 0, %s118
      %s121 = sphi 0, %s120
      %s135 = sphi 0, %s121
      %s139 = sphi 0, %s139
      %s141 = sphi 0, %s139
      %s142 = sphi 0, %s141
      %s156 = sphi 0, %s142
      %s160 = sphi 0, %s160
      %s162 = sphi 0, %s160
      %s163 = sphi 0, %s162
      %s177 = sphi 0, %s163
      %s181 = sphi 0, %s181
      %s183 = sphi 0, %s181
      %s184 = sphi 0, %s183
      %s198 = sphi 0, %s184
      %s202 = sphi 0, %s202
      %s204 = sphi 0, %s202
      %s205 = sphi 0, %s204
      %s219 = sphi 0, %s205
      %s223 = sphi 0, %s223
      %s225 = sphi 0, %s223
      %s226 = sphi 0, %s225
      %s240 = sphi 0, %s226
      %s244 = sphi 0, %s244
      %s246 = sphi 0, %s244
      %s247 = sphi 0, %s246
      %s261 = sphi 0, %s247
      %s265 = sphi 0, %s265
      %s267 = sphi 0, %s265
      %s268 = sphi 0, %s267
      %s282 = sphi 0, %s268
      %s286 = sphi 0, %s286
      %s288 = sphi 0, %s286
      %s289 = sphi 0, %s288
      %s303 = sphi 0, %s289
      %s307 = sphi 0, %s307
      %s309 = sphi 0, %s307
      %s310 = sphi 0, %s309
      %s324 = sphi 0, %s310
      %s328 = sphi 0, %s328
      %s330 = sphi 0, %s328
      %s331 = sphi 0, %s330
      %s345 = sphi 0, %s331
      %s349 = sphi 0, %s349
      %s351 = sphi 0, %s349
      %s352 = sphi 0, %s351
      %s366 = sphi 0, %s352
      %s370 = sphi 0, %s370
      %s372 = sphi 0, %s370
      %s373 = sphi 0, %s372
      %s387 = sphi 0, %s373
      %s391 = sphi 0, %s391
      %s393 = sphi 0, %s391
      %s394 = sphi 0, %s393
      %s408 = sphi 0, %s394
      %s412 = sphi 0, %s412
      %s414 = sphi 0, %s412
      %s415 = sphi 0, %s414
      %s429 = sphi 0, %s415
      %s433 = sphi 0, %s433
      %s435 = sphi 0, %s433
      %s436 = sphi 0, %s435
      %s450 = sphi 0, %s436
      %s454 = sphi 0, %s454
      %s456 = sphi 0, %s454
      %s457 = sphi 0, %s456
      %s471 = sphi 0, %s457
      %s475 = sphi 0, %s475
      %s477 = sphi 0, %s475
      %s478 = sphi 0, %s477
      %s492 = sphi 0, %s478
      %s496 = sphi 0, %s496
      %s498 = sphi 0, %s496
      %s499 = sphi 0, %s498
      %s513 = sphi 0, %s499
      %s517 = sphi 0, %s517
      %s519 = sphi 0, %s517
      %s520 = sphi 0, %s519
      %s534 = sphi 0, %s520
      %s540 = sphi 0, %s542
      %s543 = sphi 0, %s540
      %s544 = sphi 0, %s543
      %s560 = sphi 0, %s544
    $region4: #{tpu_custom_call.1} parent=1 // loop_header_branch
      %45 = sbr.rel (%p43) target = $region8
    $region5: #{tpu_custom_call.1} parent=1 // loop_body
      %s47 = ssub.s32 %s42, 1
      %s48 = ssub.s32 %s42, 2
      %s49 = sadd.s32 %s42, 1
      %s50 = ssub.s32 %s42, %s49
      %p51 = scmp.eq.s32.totalorder %s50, 0
      %s53 = sadd.s32 %s52, 1
      %s54 = scalar_select %p51, %s52, %s53
      %p57 = pneg %p51
      %p58 = scmp.eq.s32.totalorder %s42, 1
      %p59 = por %p57, %p58
      %p60 = scmp.ne.s32.totalorder %s52, %s55
      %p61 = scmp.eq.s32.totalorder %s42, 0
      %p62 = por %p60, %p61
      %p63 = scmp.ne.s32.totalorder %s52, %s55
      %p64 = scmp.eq.s32.totalorder %s47, 1
      %p65 = por %p63, %p64
      %p66 = scmp.ne.s32.totalorder %s55, %s56
      %p67 = scmp.eq.s32.totalorder %s47, 0
      %p68 = por %p66, %p67
      %p69 = scmp.ne.s32.totalorder %s55, %s56
      %p70 = scmp.eq.s32.totalorder %s48, 1
      %p71 = por %p69, %p70
      %p73 = scmp.ne.s32.totalorder %s56, %s72
      %p74 = scmp.eq.s32.totalorder %s48, 0
      %p75 = por %p73, %p74
      %s77 = sadd.s32 %s76, 1
      %p80 = scmp.eq.s32.totalorder %s42, 1
      %p81 = scmp.ne.s32.totalorder %s76, %s78
      %p82 = scmp.eq.s32.totalorder %s42, 0
      %p83 = por %p81, %p82
      %p84 = scmp.ne.s32.totalorder %s76, %s78
      %p85 = scmp.eq.s32.totalorder %s47, 1
      %p86 = por %p84, %p85
      %p87 = scmp.ne.s32.totalorder %s78, %s79
      %p88 = scmp.eq.s32.totalorder %s47, 0
      %p89 = por %p87, %p88
      %p90 = scmp.ne.s32.totalorder %s78, %s79
      %p91 = scmp.eq.s32.totalorder %s48, 1
      %p92 = por %p90, %p91
      %p94 = scmp.ne.s32.totalorder %s79, %s93
      %p95 = scmp.eq.s32.totalorder %s48, 0
      %p96 = por %p94, %p95
      %s98 = sadd.s32 %s97, 1
      %p101 = scmp.eq.s32.totalorder %s42, 1
      %p102 = scmp.ne.s32.totalorder %s97, %s99
      %p103 = scmp.eq.s32.totalorder %s42, 0
      %p104 = por %p102, %p103
      %p105 = scmp.ne.s32.totalorder %s97, %s99
      %p106 = scmp.eq.s32.totalorder %s47, 1
      %p107 = por %p105, %p106
      %p108 = scmp.ne.s32.totalorder %s99, %s100
      %p109 = scmp.eq.s32.totalorder %s47, 0
      %p110 = por %p108, %p109
      %p111 = scmp.ne.s32.totalorder %s99, %s100
      %p112 = scmp.eq.s32.totalorder %s48, 1
      %p113 = por %p111, %p112
      %p115 = scmp.ne.s32.totalorder %s100, %s114
      %p116 = scmp.eq.s32.totalorder %s48, 0
      %p117 = por %p115, %p116
      %s119 = sadd.s32 %s118, 1
      %p122 = scmp.eq.s32.totalorder %s42, 1
      %p123 = scmp.ne.s32.totalorder %s118, %s120
      %p124 = scmp.eq.s32.totalorder %s42, 0
      %p125 = por %p123, %p124
      %p126 = scmp.ne.s32.totalorder %s118, %s120
      %p127 = scmp.eq.s32.totalorder %s47, 1
      %p128 = por %p126, %p127
      %p129 = scmp.ne.s32.totalorder %s120, %s121
      %p130 = scmp.eq.s32.totalorder %s47, 0
      %p131 = por %p129, %p130
      %p132 = scmp.ne.s32.totalorder %s120, %s121
      %p133 = scmp.eq.s32.totalorder %s48, 1
      %p134 = por %p132, %p133
      %p136 = scmp.ne.s32.totalorder %s121, %s135
      %p137 = scmp.eq.s32.totalorder %s48, 0
      %p138 = por %p136, %p137
      %s140 = sadd.s32 %s139, 1
      %p143 = scmp.eq.s32.totalorder %s42, 1
      %p144 = scmp.ne.s32.totalorder %s139, %s141
      %p145 = scmp.eq.s32.totalorder %s42, 0
      %p146 = por %p144, %p145
      %p147 = scmp.ne.s32.totalorder %s139, %s141
      %p148 = scmp.eq.s32.totalorder %s47, 1
      %p149 = por %p147, %p148
      %p150 = scmp.ne.s32.totalorder %s141, %s142
      %p151 = scmp.eq.s32.totalorder %s47, 0
      %p152 = por %p150, %p151
      %p153 = scmp.ne.s32.totalorder %s141, %s142
      %p154 = scmp.eq.s32.totalorder %s48, 1
      %p155 = por %p153, %p154
      %p157 = scmp.ne.s32.totalorder %s142, %s156
      %p158 = scmp.eq.s32.totalorder %s48, 0
      %p159 = por %p157, %p158
      %s161 = sadd.s32 %s160, 1
      %p164 = scmp.eq.s32.totalorder %s42, 1
      %p165 = scmp.ne.s32.totalorder %s160, %s162
      %p166 = scmp.eq.s32.totalorder %s42, 0
      %p167 = por %p165, %p166
      %p168 = scmp.ne.s32.totalorder %s160, %s162
      %p169 = scmp.eq.s32.totalorder %s47, 1
      %p170 = por %p168, %p169
      %p171 = scmp.ne.s32.totalorder %s162, %s163
      %p172 = scmp.eq.s32.totalorder %s47, 0
      %p173 = por %p171, %p172
      %p174 = scmp.ne.s32.totalorder %s162, %s163
      %p175 = scmp.eq.s32.totalorder %s48, 1
      %p176 = por %p174, %p175
      %p178 = scmp.ne.s32.totalorder %s163, %s177
      %p179 = scmp.eq.s32.totalorder %s48, 0
      %p180 = por %p178, %p179
      %s182 = sadd.s32 %s181, 1
      %p185 = scmp.eq.s32.totalorder %s42, 1
      %p186 = scmp.ne.s32.totalorder %s181, %s183
      %p187 = scmp.eq.s32.totalorder %s42, 0
      %p188 = por %p186, %p187
      %p189 = scmp.ne.s32.totalorder %s181, %s183
      %p190 = scmp.eq.s32.totalorder %s47, 1
      %p191 = por %p189, %p190
      %p192 = scmp.ne.s32.totalorder %s183, %s184
      %p193 = scmp.eq.s32.totalorder %s47, 0
      %p194 = por %p192, %p193
      %p195 = scmp.ne.s32.totalorder %s183, %s184
      %p196 = scmp.eq.s32.totalorder %s48, 1
      %p197 = por %p195, %p196
      %p199 = scmp.ne.s32.totalorder %s184, %s198
      %p200 = scmp.eq.s32.totalorder %s48, 0
      %p201 = por %p199, %p200
      %s203 = sadd.s32 %s202, 1
      %p206 = scmp.eq.s32.totalorder %s42, 1
      %p207 = scmp.ne.s32.totalorder %s202, %s204
      %p208 = scmp.eq.s32.totalorder %s42, 0
      %p209 = por %p207, %p208
      %p210 = scmp.ne.s32.totalorder %s202, %s204
      %p211 = scmp.eq.s32.totalorder %s47, 1
      %p212 = por %p210, %p211
      %p213 = scmp.ne.s32.totalorder %s204, %s205
      %p214 = scmp.eq.s32.totalorder %s47, 0
      %p215 = por %p213, %p214
      %p216 = scmp.ne.s32.totalorder %s204, %s205
      %p217 = scmp.eq.s32.totalorder %s48, 1
      %p218 = por %p216, %p217
      %p220 = scmp.ne.s32.totalorder %s205, %s219
      %p221 = scmp.eq.s32.totalorder %s48, 0
      %p222 = por %p220, %p221
      %s224 = sadd.s32 %s223, 1
      %p227 = scmp.eq.s32.totalorder %s42, 1
      %p228 = scmp.ne.s32.totalorder %s223, %s225
      %p229 = scmp.eq.s32.totalorder %s42, 0
      %p230 = por %p228, %p229
      %p231 = scmp.ne.s32.totalorder %s223, %s225
      %p232 = scmp.eq.s32.totalorder %s47, 1
      %p233 = por %p231, %p232
      %p234 = scmp.ne.s32.totalorder %s225, %s226
      %p235 = scmp.eq.s32.totalorder %s47, 0
      %p236 = por %p234, %p235
      %p237 = scmp.ne.s32.totalorder %s225, %s226
      %p238 = scmp.eq.s32.totalorder %s48, 1
      %p239 = por %p237, %p238
      %p241 = scmp.ne.s32.totalorder %s226, %s240
      %p242 = scmp.eq.s32.totalorder %s48, 0
      %p243 = por %p241, %p242
      %s245 = sadd.s32 %s244, 1
      %p248 = scmp.eq.s32.totalorder %s42, 1
      %p249 = scmp.ne.s32.totalorder %s244, %s246
      %p250 = scmp.eq.s32.totalorder %s42, 0
      %p251 = por %p249, %p250
      %p252 = scmp.ne.s32.totalorder %s244, %s246
      %p253 = scmp.eq.s32.totalorder %s47, 1
      %p254 = por %p252, %p253
      %p255 = scmp.ne.s32.totalorder %s246, %s247
      %p256 = scmp.eq.s32.totalorder %s47, 0
      %p257 = por %p255, %p256
      %p258 = scmp.ne.s32.totalorder %s246, %s247
      %p259 = scmp.eq.s32.totalorder %s48, 1
      %p260 = por %p258, %p259
      %p262 = scmp.ne.s32.totalorder %s247, %s261
      %p263 = scmp.eq.s32.totalorder %s48, 0
      %p264 = por %p262, %p263
      %s266 = sadd.s32 %s265, 1
      %p269 = scmp.eq.s32.totalorder %s42, 1
      %p270 = scmp.ne.s32.totalorder %s265, %s267
      %p271 = scmp.eq.s32.totalorder %s42, 0
      %p272 = por %p270, %p271
      %p273 = scmp.ne.s32.totalorder %s265, %s267
      %p274 = scmp.eq.s32.totalorder %s47, 1
      %p275 = por %p273, %p274
      %p276 = scmp.ne.s32.totalorder %s267, %s268
      %p277 = scmp.eq.s32.totalorder %s47, 0
      %p278 = por %p276, %p277
      %p279 = scmp.ne.s32.totalorder %s267, %s268
      %p280 = scmp.eq.s32.totalorder %s48, 1
      %p281 = por %p279, %p280
      %p283 = scmp.ne.s32.totalorder %s268, %s282
      %p284 = scmp.eq.s32.totalorder %s48, 0
      %p285 = por %p283, %p284
      %s287 = sadd.s32 %s286, 1
      %p290 = scmp.eq.s32.totalorder %s42, 1
      %p291 = scmp.ne.s32.totalorder %s286, %s288
      %p292 = scmp.eq.s32.totalorder %s42, 0
      %p293 = por %p291, %p292
      %p294 = scmp.ne.s32.totalorder %s286, %s288
      %p295 = scmp.eq.s32.totalorder %s47, 1
      %p296 = por %p294, %p295
      %p297 = scmp.ne.s32.totalorder %s288, %s289
      %p298 = scmp.eq.s32.totalorder %s47, 0
      %p299 = por %p297, %p298
      %p300 = scmp.ne.s32.totalorder %s288, %s289
      %p301 = scmp.eq.s32.totalorder %s48, 1
      %p302 = por %p300, %p301
      %p304 = scmp.ne.s32.totalorder %s289, %s303
      %p305 = scmp.eq.s32.totalorder %s48, 0
      %p306 = por %p304, %p305
      %s308 = sadd.s32 %s307, 1
      %p311 = scmp.eq.s32.totalorder %s42, 1
      %p312 = scmp.ne.s32.totalorder %s307, %s309
      %p313 = scmp.eq.s32.totalorder %s42, 0
      %p314 = por %p312, %p313
      %p315 = scmp.ne.s32.totalorder %s307, %s309
      %p316 = scmp.eq.s32.totalorder %s47, 1
      %p317 = por %p315, %p316
      %p318 = scmp.ne.s32.totalorder %s309, %s310
      %p319 = scmp.eq.s32.totalorder %s47, 0
      %p320 = por %p318, %p319
      %p321 = scmp.ne.s32.totalorder %s309, %s310
      %p322 = scmp.eq.s32.totalorder %s48, 1
      %p323 = por %p321, %p322
      %p325 = scmp.ne.s32.totalorder %s310, %s324
      %p326 = scmp.eq.s32.totalorder %s48, 0
      %p327 = por %p325, %p326
      %s329 = sadd.s32 %s328, 1
      %p332 = scmp.eq.s32.totalorder %s42, 1
      %p333 = scmp.ne.s32.totalorder %s328, %s330
      %p334 = scmp.eq.s32.totalorder %s42, 0
      %p335 = por %p333, %p334
      %p336 = scmp.ne.s32.totalorder %s328, %s330
      %p337 = scmp.eq.s32.totalorder %s47, 1
      %p338 = por %p336, %p337
      %p339 = scmp.ne.s32.totalorder %s330, %s331
      %p340 = scmp.eq.s32.totalorder %s47, 0
      %p341 = por %p339, %p340
      %p342 = scmp.ne.s32.totalorder %s330, %s331
      %p343 = scmp.eq.s32.totalorder %s48, 1
      %p344 = por %p342, %p343
      %p346 = scmp.ne.s32.totalorder %s331, %s345
      %p347 = scmp.eq.s32.totalorder %s48, 0
      %p348 = por %p346, %p347
      %s350 = sadd.s32 %s349, 1
      %p353 = scmp.eq.s32.totalorder %s42, 1
      %p354 = scmp.ne.s32.totalorder %s349, %s351
      %p355 = scmp.eq.s32.totalorder %s42, 0
      %p356 = por %p354, %p355
      %p357 = scmp.ne.s32.totalorder %s349, %s351
      %p358 = scmp.eq.s32.totalorder %s47, 1
      %p359 = por %p357, %p358
      %p360 = scmp.ne.s32.totalorder %s351, %s352
      %p361 = scmp.eq.s32.totalorder %s47, 0
      %p362 = por %p360, %p361
      %p363 = scmp.ne.s32.totalorder %s351, %s352
      %p364 = scmp.eq.s32.totalorder %s48, 1
      %p365 = por %p363, %p364
      %p367 = scmp.ne.s32.totalorder %s352, %s366
      %p368 = scmp.eq.s32.totalorder %s48, 0
      %p369 = por %p367, %p368
      %s371 = sadd.s32 %s370, 1
      %p374 = scmp.eq.s32.totalorder %s42, 1
      %p375 = scmp.ne.s32.totalorder %s370, %s372
      %p376 = scmp.eq.s32.totalorder %s42, 0
      %p377 = por %p375, %p376
      %p378 = scmp.ne.s32.totalorder %s370, %s372
      %p379 = scmp.eq.s32.totalorder %s47, 1
      %p380 = por %p378, %p379
      %p381 = scmp.ne.s32.totalorder %s372, %s373
      %p382 = scmp.eq.s32.totalorder %s47, 0
      %p383 = por %p381, %p382
      %p384 = scmp.ne.s32.totalorder %s372, %s373
      %p385 = scmp.eq.s32.totalorder %s48, 1
      %p386 = por %p384, %p385
      %p388 = scmp.ne.s32.totalorder %s373, %s387
      %p389 = scmp.eq.s32.totalorder %s48, 0
      %p390 = por %p388, %p389
      %s392 = sadd.s32 %s391, 1
      %p395 = scmp.eq.s32.totalorder %s42, 1
      %p396 = scmp.ne.s32.totalorder %s391, %s393
      %p397 = scmp.eq.s32.totalorder %s42, 0
      %p398 = por %p396, %p397
      %p399 = scmp.ne.s32.totalorder %s391, %s393
      %p400 = scmp.eq.s32.totalorder %s47, 1
      %p401 = por %p399, %p400
      %p402 = scmp.ne.s32.totalorder %s393, %s394
      %p403 = scmp.eq.s32.totalorder %s47, 0
      %p404 = por %p402, %p403
      %p405 = scmp.ne.s32.totalorder %s393, %s394
      %p406 = scmp.eq.s32.totalorder %s48, 1
      %p407 = por %p405, %p406
      %p409 = scmp.ne.s32.totalorder %s394, %s408
      %p410 = scmp.eq.s32.totalorder %s48, 0
      %p411 = por %p409, %p410
      %s413 = sadd.s32 %s412, 1
      %p416 = scmp.eq.s32.totalorder %s42, 1
      %p417 = scmp.ne.s32.totalorder %s412, %s414
      %p418 = scmp.eq.s32.totalorder %s42, 0
      %p419 = por %p417, %p418
      %p420 = scmp.ne.s32.totalorder %s412, %s414
      %p421 = scmp.eq.s32.totalorder %s47, 1
      %p422 = por %p420, %p421
      %p423 = scmp.ne.s32.totalorder %s414, %s415
      %p424 = scmp.eq.s32.totalorder %s47, 0
      %p425 = por %p423, %p424
      %p426 = scmp.ne.s32.totalorder %s414, %s415
      %p427 = scmp.eq.s32.totalorder %s48, 1
      %p428 = por %p426, %p427
      %p430 = scmp.ne.s32.totalorder %s415, %s429
      %p431 = scmp.eq.s32.totalorder %s48, 0
      %p432 = por %p430, %p431
      %s434 = sadd.s32 %s433, 1
      %p437 = scmp.eq.s32.totalorder %s42, 1
      %p438 = scmp.ne.s32.totalorder %s433, %s435
      %p439 = scmp.eq.s32.totalorder %s42, 0
      %p440 = por %p438, %p439
      %p441 = scmp.ne.s32.totalorder %s433, %s435
      %p442 = scmp.eq.s32.totalorder %s47, 1
      %p443 = por %p441, %p442
      %p444 = scmp.ne.s32.totalorder %s435, %s436
      %p445 = scmp.eq.s32.totalorder %s47, 0
      %p446 = por %p444, %p445
      %p447 = scmp.ne.s32.totalorder %s435, %s436
      %p448 = scmp.eq.s32.totalorder %s48, 1
      %p449 = por %p447, %p448
      %p451 = scmp.ne.s32.totalorder %s436, %s450
      %p452 = scmp.eq.s32.totalorder %s48, 0
      %p453 = por %p451, %p452
      %s455 = sadd.s32 %s454, 1
      %p458 = scmp.eq.s32.totalorder %s42, 1
      %p459 = scmp.ne.s32.totalorder %s454, %s456
      %p460 = scmp.eq.s32.totalorder %s42, 0
      %p461 = por %p459, %p460
      %p462 = scmp.ne.s32.totalorder %s454, %s456
      %p463 = scmp.eq.s32.totalorder %s47, 1
      %p464 = por %p462, %p463
      %p465 = scmp.ne.s32.totalorder %s456, %s457
      %p466 = scmp.eq.s32.totalorder %s47, 0
      %p467 = por %p465, %p466
      %p468 = scmp.ne.s32.totalorder %s456, %s457
      %p469 = scmp.eq.s32.totalorder %s48, 1
      %p470 = por %p468, %p469
      %p472 = scmp.ne.s32.totalorder %s457, %s471
      %p473 = scmp.eq.s32.totalorder %s48, 0
      %p474 = por %p472, %p473
      %s476 = sadd.s32 %s475, 1
      %p479 = scmp.eq.s32.totalorder %s42, 1
      %p480 = scmp.ne.s32.totalorder %s475, %s477
      %p481 = scmp.eq.s32.totalorder %s42, 0
      %p482 = por %p480, %p481
      %p483 = scmp.ne.s32.totalorder %s475, %s477
      %p484 = scmp.eq.s32.totalorder %s47, 1
      %p485 = por %p483, %p484
      %p486 = scmp.ne.s32.totalorder %s477, %s478
      %p487 = scmp.eq.s32.totalorder %s47, 0
      %p488 = por %p486, %p487
      %p489 = scmp.ne.s32.totalorder %s477, %s478
      %p490 = scmp.eq.s32.totalorder %s48, 1
      %p491 = por %p489, %p490
      %p493 = scmp.ne.s32.totalorder %s478, %s492
      %p494 = scmp.eq.s32.totalorder %s48, 0
      %p495 = por %p493, %p494
      %s497 = sadd.s32 %s496, 1
      %p500 = scmp.eq.s32.totalorder %s42, 1
      %p501 = scmp.ne.s32.totalorder %s496, %s498
      %p502 = scmp.eq.s32.totalorder %s42, 0
      %p503 = por %p501, %p502
      %p504 = scmp.ne.s32.totalorder %s496, %s498
      %p505 = scmp.eq.s32.totalorder %s47, 1
      %p506 = por %p504, %p505
      %p507 = scmp.ne.s32.totalorder %s498, %s499
      %p508 = scmp.eq.s32.totalorder %s47, 0
      %p509 = por %p507, %p508
      %p510 = scmp.ne.s32.totalorder %s498, %s499
      %p511 = scmp.eq.s32.totalorder %s48, 1
      %p512 = por %p510, %p511
      %p514 = scmp.ne.s32.totalorder %s499, %s513
      %p515 = scmp.eq.s32.totalorder %s48, 0
      %p516 = por %p514, %p515
      %s518 = sadd.s32 %s517, 1
      %p521 = scmp.eq.s32.totalorder %s42, 1
      %p522 = scmp.ne.s32.totalorder %s517, %s519
      %p523 = scmp.eq.s32.totalorder %s42, 0
      %p524 = por %p522, %p523
      %p525 = scmp.ne.s32.totalorder %s517, %s519
      %p526 = scmp.eq.s32.totalorder %s47, 1
      %p527 = por %p525, %p526
      %p528 = scmp.ne.s32.totalorder %s519, %s520
      %p529 = scmp.eq.s32.totalorder %s47, 0
      %p530 = por %p528, %p529
      %p531 = scmp.ne.s32.totalorder %s519, %s520
      %p532 = scmp.eq.s32.totalorder %s48, 1
      %p533 = por %p531, %p532
      %p535 = scmp.ne.s32.totalorder %s520, %s534
      %p536 = scmp.eq.s32.totalorder %s48, 0
      %p537 = por %p535, %p536
      %s538 = ssub.s32 %s42, %s49
      %p539 = scmp.eq.s32.totalorder %s538, 0
      %s541 = sadd.s32 %s540, 1
      %s542 = scalar_select %p539, %s540, %s541
      %p545 = pneg %p539
      %p546 = scmp.eq.s32.totalorder %s42, 1
      %p547 = por %p545, %p546
      %p548 = scmp.ne.s32.totalorder %s540, %s543
      %p549 = scmp.eq.s32.totalorder %s42, 0
      %p550 = por %p548, %p549
      %p551 = scmp.ne.s32.totalorder %s540, %s543
      %p552 = scmp.eq.s32.totalorder %s47, 1
      %p553 = por %p551, %p552
      %p554 = scmp.ne.s32.totalorder %s543, %s544
      %p555 = scmp.eq.s32.totalorder %s47, 0
      %p556 = por %p554, %p555
      %p557 = scmp.ne.s32.totalorder %s543, %s544
      %p558 = scmp.eq.s32.totalorder %s48, 1
      %p559 = por %p557, %p558
      %p561 = scmp.ne.s32.totalorder %s544, %s560
      %p562 = scmp.eq.s32.totalorder %s48, 0
      %p563 = por %p561, %p562
      %p564 = scmp.le.s32.totalorder 1, %s42
      %p565 = scmp.lt.s32.totalorder %s42, 3
      %p566 = pnand %p564, %p565
      %p567 = pneg %p566
      // Predicated region
      $region9: #{tpu_custom_call.1} parent=5 // pred_check
        _
      $region10: #{tpu_custom_call.1} parent=5 // pred_check_branch
        %569 = sbr.rel (%p566) target = $region12
      $region11: #{tpu_custom_call.1} parent=5 // pred_region
        %s570 = ssub.s32 %s42, 1
        // Predicated region
        $region13: #{tpu_custom_call.1} parent=11 // pred_check
          %p571 = pneg %p89
        $region14: #{tpu_custom_call.1} parent=11 // pred_check_branch
          %573 = sbr.rel (%p571) target = $region16
        $region15: #{tpu_custom_call.1} parent=11 // pred_region
          _
        $region16: #{tpu_custom_call.1} parent=11 // pred_fallthru
          _
        // Predicated region
        $region17: #{tpu_custom_call.1} parent=11 // pred_check
          %p574 = pneg %p110
        $region18: #{tpu_custom_call.1} parent=11 // pred_check_branch
          %576 = sbr.rel (%p574) target = $region20
        $region19: #{tpu_custom_call.1} parent=11 // pred_region
          _
        $region20: #{tpu_custom_call.1} parent=11 // pred_fallthru
          _
        // Predicated region
        $region21: #{tpu_custom_call.1} parent=11 // pred_check
          %p577 = pneg %p131
        $region22: #{tpu_custom_call.1} parent=11 // pred_check_branch
          %579 = sbr.rel (%p577) target = $region24
        $region23: #{tpu_custom_call.1} parent=11 // pred_region
          _
        $region24: #{tpu_custom_call.1} parent=11 // pred_fallthru
          _
        // Predicated region
        $region25: #{tpu_custom_call.1} parent=11 // pred_check
          %p580 = pneg %p152
        $region26: #{tpu_custom_call.1} parent=11 // pred_check_branch
          %582 = sbr.rel (%p580) target = $region28
        $region27: #{tpu_custom_call.1} parent=11 // pred_region
          %s584 = ssub.s32 16, 16
          %585 = vsyncadd [#allocation6], %s584
          %s587 = sshll.u32 [#allocation5], 4
          %s588 = int_to_ptr.vmem [resolvable:$true] %s587
          %590 = dma.hbm_to_vmem [thread:$0]  %s4, 16, %s588, [#allocation6]
        $region28: #{tpu_custom_call.1} parent=11 // pred_fallthru
          _
        // Predicated region
        $region29: #{tpu_custom_call.1} parent=11 // pred_check
          %p591 = pneg %p173
        $region30: #{tpu_custom_call.1} parent=11 // pred_check_branch
          %593 = sbr.rel (%p591) target = $region32
        $region31: #{tpu_custom_call.1} parent=11 // pred_region
          _
        $region32: #{tpu_custom_call.1} parent=11 // pred_fallthru
          _
        // Predicated region
        $region33: #{tpu_custom_call.1} parent=11 // pred_check
          %p594 = pneg %p194
        $region34: #{tpu_custom_call.1} parent=11 // pred_check_branch
          %596 = sbr.rel (%p594) target = $region36
        $region35: #{tpu_custom_call.1} parent=11 // pred_region
          %s598 = ssub.s32 16, 16
          %599 = vsyncadd [#allocation6], %s598
          %s601 = sshll.u32 [#allocation7], 4
          %s602 = int_to_ptr.vmem [resolvable:$true] %s601
          %604 = dma.hbm_to_vmem [thread:$0]  %s6, 16, %s602, [#allocation6]
        $region36: #{tpu_custom_call.1} parent=11 // pred_fallthru
          _
        // Predicated region
        $region37: #{tpu_custom_call.1} parent=11 // pred_check
          %p605 = pneg %p215
        $region38: #{tpu_custom_call.1} parent=11 // pred_check_branch
          %607 = sbr.rel (%p605) target = $region40
        $region39: #{tpu_custom_call.1} parent=11 // pred_region
          _
        $region40: #{tpu_custom_call.1} parent=11 // pred_fallthru
          _
        // Predicated region
        $region41: #{tpu_custom_call.1} parent=11 // pred_check
          %p608 = pneg %p236
        $region42: #{tpu_custom_call.1} parent=11 // pred_check_branch
          %610 = sbr.rel (%p608) target = $region44
        $region43: #{tpu_custom_call.1} parent=11 // pred_region
          %s612 = ssub.s32 16, 16
          %613 = vsyncadd [#allocation9], %s612
          %s615 = sshll.u32 [#allocation8], 4
          %s616 = int_to_ptr.vmem [resolvable:$true] %s615
          %618 = dma.hbm_to_vmem [thread:$0]  %s8, 16, %s616, [#allocation9]
        $region44: #{tpu_custom_call.1} parent=11 // pred_fallthru
          _
        // Predicated region
        $region45: #{tpu_custom_call.1} parent=11 // pred_check
          %p619 = pneg %p257
        $region46: #{tpu_custom_call.1} parent=11 // pred_check_branch
          %621 = sbr.rel (%p619) target = $region48
        $region47: #{tpu_custom_call.1} parent=11 // pred_region
          _
        $region48: #{tpu_custom_call.1} parent=11 // pred_fallthru
          _
        // Predicated region
        $region49: #{tpu_custom_call.1} parent=11 // pred_check
          %p622 = pneg %p278
        $region50: #{tpu_custom_call.1} parent=11 // pred_check_branch
          %624 = sbr.rel (%p622) target = $region52
        $region51: #{tpu_custom_call.1} parent=11 // pred_region
          %s626 = ssub.s32 16, 16
          %627 = vsyncadd [#allocation9], %s626
          %s629 = sshll.u32 [#allocation10], 4
          %s630 = int_to_ptr.vmem [resolvable:$true] %s629
          %632 = dma.hbm_to_vmem [thread:$0]  %s10, 16, %s630, [#allocation9]
        $region52: #{tpu_custom_call.1} parent=11 // pred_fallthru
          _
        // Predicated region
        $region53: #{tpu_custom_call.1} parent=11 // pred_check
          %p633 = pneg %p299
        $region54: #{tpu_custom_call.1} parent=11 // pred_check_branch
          %635 = sbr.rel (%p633) target = $region56
        $region55: #{tpu_custom_call.1} parent=11 // pred_region
          %s637 = ssub.s32 64, 64
          %638 = vsyncadd [#allocation12], %s637
          %s640 = sshll.u32 [#allocation11], 4
          %s641 = int_to_ptr.vmem [resolvable:$true] %s640
          %643 = dma.hbm_to_vmem [thread:$0]  %s11, 64, %s641, [#allocation12]
        $region56: #{tpu_custom_call.1} parent=11 // pred_fallthru
          _
        // Predicated region
        $region57: #{tpu_custom_call.1} parent=11 // pred_check
          %p644 = pneg %p320
        $region58: #{tpu_custom_call.1} parent=11 // pred_check_branch
          %646 = sbr.rel (%p644) target = $region60
        $region59: #{tpu_custom_call.1} parent=11 // pred_region
          %s648 = ssub.s32 16, 16
          %649 = vsyncadd [#allocation12], %s648
          %s651 = sshll.u32 [#allocation13], 4
          %s652 = int_to_ptr.vmem [resolvable:$true] %s651
          %654 = dma.hbm_to_vmem [thread:$0]  %s12, 16, %s652, [#allocation12]
        $region60: #{tpu_custom_call.1} parent=11 // pred_fallthru
          _
        // Predicated region
        $region61: #{tpu_custom_call.1} parent=11 // pred_check
          %p655 = pneg %p341
        $region62: #{tpu_custom_call.1} parent=11 // pred_check_branch
          %657 = sbr.rel (%p655) target = $region64
        $region63: #{tpu_custom_call.1} parent=11 // pred_region
          %s659 = ssub.s32 64, 64
          %660 = vsyncadd [#allocation15], %s659
          %s662 = sshll.u32 [#allocation14], 4
          %s663 = int_to_ptr.vmem [resolvable:$true] %s662
          %665 = dma.hbm_to_vmem [thread:$0]  %s13, 64, %s663, [#allocation15]
        $region64: #{tpu_custom_call.1} parent=11 // pred_fallthru
          _
        // Predicated region
        $region65: #{tpu_custom_call.1} parent=11 // pred_check
          %p666 = pneg %p362
        $region66: #{tpu_custom_call.1} parent=11 // pred_check_branch
          %668 = sbr.rel (%p666) target = $region68
        $region67: #{tpu_custom_call.1} parent=11 // pred_region
          %s670 = ssub.s32 16, 16
          %671 = vsyncadd [#allocation15], %s670
          %s673 = sshll.u32 [#allocation16], 4
          %s674 = int_to_ptr.vmem [resolvable:$true] %s673
          %676 = dma.hbm_to_vmem [thread:$0]  %s14, 16, %s674, [#allocation15]
        $region68: #{tpu_custom_call.1} parent=11 // pred_fallthru
          _
        // Predicated region
        $region69: #{tpu_custom_call.1} parent=11 // pred_check
          %p677 = pneg %p383
        $region70: #{tpu_custom_call.1} parent=11 // pred_check_branch
          %679 = sbr.rel (%p677) target = $region72
        $region71: #{tpu_custom_call.1} parent=11 // pred_region
          %s681 = ssub.s32 128, 128
          %682 = vsyncadd [#allocation18], %s681
          %s683 = sshll.u32 [#allocation17], 4
          %s684 = int_to_ptr.vmem [resolvable:$true] %s683
          %689 = dma.hbm_to_vmem [thread:$0]  %s15, 128, %s684, [#allocation18], 64, 64, 4
        $region72: #{tpu_custom_call.1} parent=11 // pred_fallthru
          _
        // Predicated region
        $region73: #{tpu_custom_call.1} parent=11 // pred_check
          %p690 = pneg %p404
        $region74: #{tpu_custom_call.1} parent=11 // pred_check_branch
          %692 = sbr.rel (%p690) target = $region76
        $region75: #{tpu_custom_call.1} parent=11 // pred_region
          %s694 = ssub.s32 16, 16
          %695 = vsyncadd [#allocation18], %s694
          %s697 = sshll.u32 [#allocation19], 4
          %s698 = int_to_ptr.vmem [resolvable:$true] %s697
          %700 = dma.hbm_to_vmem [thread:$0]  %s16, 16, %s698, [#allocation18]
        $region76: #{tpu_custom_call.1} parent=11 // pred_fallthru
          _
        // Predicated region
        $region77: #{tpu_custom_call.1} parent=11 // pred_check
          %p701 = pneg %p425
        $region78: #{tpu_custom_call.1} parent=11 // pred_check_branch
          %703 = sbr.rel (%p701) target = $region80
        $region79: #{tpu_custom_call.1} parent=11 // pred_region
          %s705 = ssub.s32 256, 256
          %706 = vsyncadd [#allocation21], %s705
          %s707 = sshll.u32 [#allocation20], 4
          %s708 = int_to_ptr.vmem [resolvable:$true] %s707
          %713 = dma.hbm_to_vmem [thread:$0]  %s17, 256, %s708, [#allocation21], 64, 64, 4
        $region80: #{tpu_custom_call.1} parent=11 // pred_fallthru
          _
        // Predicated region
        $region81: #{tpu_custom_call.1} parent=11 // pred_check
          %p714 = pneg %p446
        $region82: #{tpu_custom_call.1} parent=11 // pred_check_branch
          %716 = sbr.rel (%p714) target = $region84
        $region83: #{tpu_custom_call.1} parent=11 // pred_region
          %s718 = ssub.s32 16, 16
          %719 = vsyncadd [#allocation21], %s718
          %s721 = sshll.u32 [#allocation22], 4
          %s722 = int_to_ptr.vmem [resolvable:$true] %s721
          %724 = dma.hbm_to_vmem [thread:$0]  %s18, 16, %s722, [#allocation21]
        $region84: #{tpu_custom_call.1} parent=11 // pred_fallthru
          _
        // Predicated region
        $region85: #{tpu_custom_call.1} parent=11 // pred_check
          %p725 = pneg %p467
        $region86: #{tpu_custom_call.1} parent=11 // pred_check_branch
          %727 = sbr.rel (%p725) target = $region88
        $region87: #{tpu_custom_call.1} parent=11 // pred_region
          %s729 = ssub.s32 512, 512
          %730 = vsyncadd [#allocation24], %s729
          %s731 = sshll.u32 [#allocation23], 4
          %s732 = int_to_ptr.vmem [resolvable:$true] %s731
          %737 = dma.hbm_to_vmem [thread:$0]  %s19, 512, %s732, [#allocation24], 64, 64, 4
        $region88: #{tpu_custom_call.1} parent=11 // pred_fallthru
          _
        // Predicated region
        $region89: #{tpu_custom_call.1} parent=11 // pred_check
          %p738 = pneg %p488
        $region90: #{tpu_custom_call.1} parent=11 // pred_check_branch
          %740 = sbr.rel (%p738) target = $region92
        $region91: #{tpu_custom_call.1} parent=11 // pred_region
          %s742 = ssub.s32 16, 16
          %743 = vsyncadd [#allocation24], %s742
          %s745 = sshll.u32 [#allocation25], 4
          %s746 = int_to_ptr.vmem [resolvable:$true] %s745
          %748 = dma.hbm_to_vmem [thread:$0]  %s20, 16, %s746, [#allocation24]
        $region92: #{tpu_custom_call.1} parent=11 // pred_fallthru
          _
        // Predicated region
        $region93: #{tpu_custom_call.1} parent=11 // pred_check
          %p749 = pneg %p509
        $region94: #{tpu_custom_call.1} parent=11 // pred_check_branch
          %751 = sbr.rel (%p749) target = $region96
        $region95: #{tpu_custom_call.1} parent=11 // pred_region
          _
        $region96: #{tpu_custom_call.1} parent=11 // pred_fallthru
          _
        // Predicated region
        $region97: #{tpu_custom_call.1} parent=11 // pred_check
          %p752 = pneg %p530
        $region98: #{tpu_custom_call.1} parent=11 // pred_check_branch
          %754 = sbr.rel (%p752) target = $region100
        $region99: #{tpu_custom_call.1} parent=11 // pred_region
          _
        $region100: #{tpu_custom_call.1} parent=11 // pred_fallthru
          _
      $region12: #{tpu_custom_call.1} parent=5 // pred_fallthru
        _
      %p755 = scmp.lt.s32.totalorder %s42, 2
      // Predicated region
      $region101: #{tpu_custom_call.1} parent=5 // pred_check
        %p756 = pneg %p755
      $region102: #{tpu_custom_call.1} parent=5 // pred_check_branch
        %758 = sbr.rel (%p756) target = $region104
      $region103: #{tpu_custom_call.1} parent=5 // pred_region
        // Predicated region
        $region105: #{tpu_custom_call.1} parent=103 // pred_check
          %p759 = pneg %p62
        $region106: #{tpu_custom_call.1} parent=103 // pred_check_branch
          %761 = sbr.rel (%p759) target = $region108
        $region107: #{tpu_custom_call.1} parent=103 // pred_region
          %s762 = sand.u32 %s52, 1
          %s763 = scalar_lea.sflag [#allocation3], %s762
          %s764 = sand.u32 %s52, 1
          %s765 = smul.addr %s764, 16
          %s766 = scalar_lea.vmem [#allocation2], %s765
          %s767 = smul.u32 2, %s42
          %s769 = ssub.s32 256, 256
          %770 = vsyncadd %s763, %s769
          %s771 = smul.addr %s767, 2
          %s772 = smul.addr %s771, 64
          %s773 = scalar_lea.hbm %s0, %s772
          %s774 = sshll.u32 %s766, 4
          %s775 = int_to_ptr.vmem [resolvable:$true] %s774
          %780 = dma.hbm_to_vmem [thread:$0]  %s773, 256, %s775, %s763, 128, 128, 8
        $region108: #{tpu_custom_call.1} parent=103 // pred_fallthru
          _
      $region104: #{tpu_custom_call.1} parent=5 // pred_fallthru
        _
      %p781 = scmp.le.s32.totalorder 1, %s42
      %p782 = scmp.lt.s32.totalorder %s42, 3
      %p783 = pnand %p781, %p782
      %p784 = pneg %p783
      // Predicated region
      $region109: #{tpu_custom_call.1} parent=5 // pred_check
        _
      $region110: #{tpu_custom_call.1} parent=5 // pred_check_branch
        %786 = sbr.rel (%p783) target = $region112
      $region111: #{tpu_custom_call.1} parent=5 // pred_region
        %s787 = ssub.s32 %s42, 1
        %s788 = sand.u32 %s55, 1
        %s789 = scalar_lea.sflag [#allocation3], %s788
        %s790 = sand.u32 %s55, 1
        %s791 = smul.addr %s790, 16
        %s792 = scalar_lea.vmem [#allocation2], %s791
        // Predicated region
        $region113: #{tpu_custom_call.1} parent=111 // pred_check
          %p793 = pneg %p68
        $region114: #{tpu_custom_call.1} parent=111 // pred_check_branch
          %795 = sbr.rel (%p793) target = $region116
        $region115: #{tpu_custom_call.1} parent=111 // pred_region
          %796 = dma.done %s789, 256
        $region116: #{tpu_custom_call.1} parent=111 // pred_fallthru
          _
        // Predicated region
        $region117: #{tpu_custom_call.1} parent=111 // pred_check
          %p797 = pneg %p152
        $region118: #{tpu_custom_call.1} parent=111 // pred_check_branch
          %799 = sbr.rel (%p797) target = $region120
        $region119: #{tpu_custom_call.1} parent=111 // pred_region
          %800 = dma.done [#allocation6], 16
        $region120: #{tpu_custom_call.1} parent=111 // pred_fallthru
          _
        // Predicated region
        $region121: #{tpu_custom_call.1} parent=111 // pred_check
          %p801 = pneg %p194
        $region122: #{tpu_custom_call.1} parent=111 // pred_check_branch
          %803 = sbr.rel (%p801) target = $region124
        $region123: #{tpu_custom_call.1} parent=111 // pred_region
          %804 = dma.done [#allocation6], 16
        $region124: #{tpu_custom_call.1} parent=111 // pred_fallthru
          _
        // Predicated region
        $region125: #{tpu_custom_call.1} parent=111 // pred_check
          %p805 = pneg %p236
        $region126: #{tpu_custom_call.1} parent=111 // pred_check_branch
          %807 = sbr.rel (%p805) target = $region128
        $region127: #{tpu_custom_call.1} parent=111 // pred_region
          %808 = dma.done [#allocation9], 16
        $region128: #{tpu_custom_call.1} parent=111 // pred_fallthru
          _
        // Predicated region
        $region129: #{tpu_custom_call.1} parent=111 // pred_check
          %p809 = pneg %p278
        $region130: #{tpu_custom_call.1} parent=111 // pred_check_branch
          %811 = sbr.rel (%p809) target = $region132
        $region131: #{tpu_custom_call.1} parent=111 // pred_region
          %812 = dma.done [#allocation9], 16
        $region132: #{tpu_custom_call.1} parent=111 // pred_fallthru
          _
        // Predicated region
        $region133: #{tpu_custom_call.1} parent=111 // pred_check
          %p813 = pneg %p299
        $region134: #{tpu_custom_call.1} parent=111 // pred_check_branch
          %815 = sbr.rel (%p813) target = $region136
        $region135: #{tpu_custom_call.1} parent=111 // pred_region
          %816 = dma.done [#allocation12], 64
        $region136: #{tpu_custom_call.1} parent=111 // pred_fallthru
          _
        // Predicated region
        $region137: #{tpu_custom_call.1} parent=111 // pred_check
          %p817 = pneg %p320
        $region138: #{tpu_custom_call.1} parent=111 // pred_check_branch
          %819 = sbr.rel (%p817) target = $region140
        $region139: #{tpu_custom_call.1} parent=111 // pred_region
          %820 = dma.done [#allocation12], 16
        $region140: #{tpu_custom_call.1} parent=111 // pred_fallthru
          _
        // Predicated region
        $region141: #{tpu_custom_call.1} parent=111 // pred_check
          %p821 = pneg %p341
        $region142: #{tpu_custom_call.1} parent=111 // pred_check_branch
          %823 = sbr.rel (%p821) target = $region144
        $region143: #{tpu_custom_call.1} parent=111 // pred_region
          %824 = dma.done [#allocation15], 64
        $region144: #{tpu_custom_call.1} parent=111 // pred_fallthru
          _
        // Predicated region
        $region145: #{tpu_custom_call.1} parent=111 // pred_check
          %p825 = pneg %p362
        $region146: #{tpu_custom_call.1} parent=111 // pred_check_branch
          %827 = sbr.rel (%p825) target = $region148
        $region147: #{tpu_custom_call.1} parent=111 // pred_region
          %828 = dma.done [#allocation15], 16
        $region148: #{tpu_custom_call.1} parent=111 // pred_fallthru
          _
        // Predicated region
        $region149: #{tpu_custom_call.1} parent=111 // pred_check
          %p829 = pneg %p383
        $region150: #{tpu_custom_call.1} parent=111 // pred_check_branch
          %831 = sbr.rel (%p829) target = $region152
        $region151: #{tpu_custom_call.1} parent=111 // pred_region
          %832 = dma.done [#allocation18], 128
        $region152: #{tpu_custom_call.1} parent=111 // pred_fallthru
          _
        // Predicated region
        $region153: #{tpu_custom_call.1} parent=111 // pred_check
          %p833 = pneg %p404
        $region154: #{tpu_custom_call.1} parent=111 // pred_check_branch
          %835 = sbr.rel (%p833) target = $region156
        $region155: #{tpu_custom_call.1} parent=111 // pred_region
          %836 = dma.done [#allocation18], 16
        $region156: #{tpu_custom_call.1} parent=111 // pred_fallthru
          _
        // Predicated region
        $region157: #{tpu_custom_call.1} parent=111 // pred_check
          %p837 = pneg %p425
        $region158: #{tpu_custom_call.1} parent=111 // pred_check_branch
          %839 = sbr.rel (%p837) target = $region160
        $region159: #{tpu_custom_call.1} parent=111 // pred_region
          %840 = dma.done [#allocation21], 256
        $region160: #{tpu_custom_call.1} parent=111 // pred_fallthru
          _
        // Predicated region
        $region161: #{tpu_custom_call.1} parent=111 // pred_check
          %p841 = pneg %p446
        $region162: #{tpu_custom_call.1} parent=111 // pred_check_branch
          %843 = sbr.rel (%p841) target = $region164
        $region163: #{tpu_custom_call.1} parent=111 // pred_region
          %844 = dma.done [#allocation21], 16
        $region164: #{tpu_custom_call.1} parent=111 // pred_fallthru
          _
        // Predicated region
        $region165: #{tpu_custom_call.1} parent=111 // pred_check
          %p845 = pneg %p467
        $region166: #{tpu_custom_call.1} parent=111 // pred_check_branch
          %847 = sbr.rel (%p845) target = $region168
        $region167: #{tpu_custom_call.1} parent=111 // pred_region
          %848 = dma.done [#allocation24], 512
        $region168: #{tpu_custom_call.1} parent=111 // pred_fallthru
          _
        // Predicated region
        $region169: #{tpu_custom_call.1} parent=111 // pred_check
          %p849 = pneg %p488
        $region170: #{tpu_custom_call.1} parent=111 // pred_check_branch
          %851 = sbr.rel (%p849) target = $region172
        $region171: #{tpu_custom_call.1} parent=111 // pred_region
          %852 = dma.done [#allocation24], 16
        $region172: #{tpu_custom_call.1} parent=111 // pred_fallthru
          _
        %s853 = sand.u32 %s55, 1
        %s854 = scalar_lea.sflag [#allocation3], %s853
        %s855 = sand.u32 %s55, 1
        %s856 = smul.addr %s855, 16
        %s857 = scalar_lea.vmem [#allocation2], %s856
        %p858 = pneg %p68
        %p859 = pneg %p65
        %p860 = pneg %p89
        %p861 = pneg %p86
        %p862 = pneg %p110
        %p863 = pneg %p107
        %p864 = pneg %p131
        %p865 = pneg %p128
        %p866 = pneg %p152
        %p867 = pneg %p149
        %p868 = pneg %p173
        %p869 = pneg %p170
        %p870 = pneg %p194
        %p871 = pneg %p191
        %p872 = pneg %p215
        %p873 = pneg %p212
        %p874 = pneg %p236
        %p875 = pneg %p233
        %p876 = pneg %p257
        %p877 = pneg %p254
        %p878 = pneg %p278
        %p879 = pneg %p275
        %p880 = pneg %p299
        %p881 = pneg %p296
        %p882 = pneg %p320
        %p883 = pneg %p317
        %p884 = pneg %p341
        %p885 = pneg %p338
        %p886 = pneg %p362
        %p887 = pneg %p359
        %p888 = pneg %p383
        %p889 = pneg %p380
        %p890 = pneg %p404
        %p891 = pneg %p401
        %p892 = pneg %p425
        %p893 = pneg %p422
        %p894 = pneg %p446
        %p895 = pneg %p443
        %p896 = pneg %p467
        %p897 = pneg %p464
        %p898 = pneg %p488
        %p899 = pneg %p485
        %p900 = pneg %p509
        %p901 = pneg %p506
        %p902 = pneg %p530
        %p903 = pneg %p527
        %p904 = pneg %p556
        %p905 = pneg %p553
        %s906 = sand.u32 %s543, 1
        %s907 = scalar_lea.sflag [#allocation4], %s906
        %s908 = sand.u32 %s543, 1
        %s909 = smul.addr %s908, 32
        %s910 = scalar_lea.vmem [#allocation26], %s909
        %s911 = smul.u32 2, %s47
        %s912 = smul.u32 2, %s47
        %v914 = vld [vmem:[%s792] sm:$0xff]
        %v915 = vld [vmem:[%s792 + $0x8] sm:$0xff]
        %v916 = vld [vmem:[%s1] sm:$0xf]
        %v917 = vld [vmem:[%s1 + $0x4] sm:$0xf]
        %v918 = vld [vmem:[%s1 + $0x8] sm:$0xf]
        %v919 = vld [vmem:[%s1 + $0xc] sm:$0xf]
        %v920 = vld [vmem:[%s1 + $0x10] sm:$0xf]
        %v921 = vld [vmem:[%s1 + $0x14] sm:$0xf]
        %v922 = vld [vmem:[%s1 + $0x18] sm:$0xf]
        %v923 = vld [vmem:[%s1 + $0x1c] sm:$0xf]
        %v924 = vld [vmem:[%s1 + $0x20] sm:$0xf]
        %v925 = vld [vmem:[%s1 + $0x24] sm:$0xf]
        %v926 = vld [vmem:[%s1 + $0x28] sm:$0xf]
        %v927 = vld [vmem:[%s1 + $0x2c] sm:$0xf]
        %v928 = vld [vmem:[%s1 + $0x30] sm:$0xf]
        %v929 = vld [vmem:[%s1 + $0x34] sm:$0xf]
        %v930 = vld [vmem:[%s1 + $0x38] sm:$0xf]
        %v931 = vld [vmem:[%s1 + $0x3c] sm:$0xf]
        %v932 = vld [vmem:[%s1 + $0x40] sm:$0xf]
        %v933 = vld [vmem:[%s1 + $0x44] sm:$0xf]
        %v934 = vld [vmem:[%s1 + $0x48] sm:$0xf]
        %v935 = vld [vmem:[%s1 + $0x4c] sm:$0xf]
        %v936 = vld [vmem:[%s1 + $0x50] sm:$0xf]
        %v937 = vld [vmem:[%s1 + $0x54] sm:$0xf]
        %v938 = vld [vmem:[%s1 + $0x58] sm:$0xf]
        %v939 = vld [vmem:[%s1 + $0x5c] sm:$0xf]
        %v940 = vld [vmem:[%s1 + $0x60] sm:$0xf]
        %v941 = vld [vmem:[%s1 + $0x64] sm:$0xf]
        %v942 = vld [vmem:[%s1 + $0x68] sm:$0xf]
        %v943 = vld [vmem:[%s1 + $0x6c] sm:$0xf]
        %v944 = vld [vmem:[%s1 + $0x70] sm:$0xf]
        %v945 = vld [vmem:[%s1 + $0x74] sm:$0xf]
        %v946 = vld [vmem:[%s1 + $0x78] sm:$0xf]
        %v947 = vld [vmem:[%s1 + $0x7c] sm:$0xf]
        %v948 = vld [vmem:[%s2] sm:$0x1]
        %v950 = vlaneseq
        %v951 = vshrl.u32 %v950, 7
        %v952 = vsub.s32 0, %v951
        %v953 = vrot.slane %v948, %v952
        %v957 = vunpack.c.l.b16 %v914
        %v958 = vunpack.c.h.b16 %v914
        %v959 = vunpack.c.l.b16 %v915
        %v960 = vunpack.c.h.b16 %v915
        %v961 = vpack.c.b16 %v959, %v957
        %v962 = vpack.c.b16 %v960, %v958
        %v997 = vunpack.c.l.b16 %v916
        %v998 = vunpack.c.l.b16 %v917
        %v999 = vunpack.c.l.b16 %v918
        %v1000 = vunpack.c.l.b16 %v919
        %v1001 = vunpack.c.l.b16 %v920
        %v1002 = vunpack.c.l.b16 %v921
        %v1003 = vunpack.c.l.b16 %v922
        %v1004 = vunpack.c.l.b16 %v923
        %v1005 = vunpack.c.l.b16 %v924
        %v1006 = vunpack.c.l.b16 %v925
        %v1007 = vunpack.c.l.b16 %v926
        %v1008 = vunpack.c.l.b16 %v927
        %v1009 = vunpack.c.l.b16 %v928
        %v1010 = vunpack.c.l.b16 %v929
        %v1011 = vunpack.c.l.b16 %v930
        %v1012 = vunpack.c.l.b16 %v931
        %v1013 = vunpack.c.l.b16 %v932
        %v1014 = vunpack.c.l.b16 %v933
        %v1015 = vunpack.c.l.b16 %v934
        %v1016 = vunpack.c.l.b16 %v935
        %v1017 = vunpack.c.l.b16 %v936
        %v1018 = vunpack.c.l.b16 %v937
        %v1019 = vunpack.c.l.b16 %v938
        %v1020 = vunpack.c.l.b16 %v939
        %v1021 = vunpack.c.l.b16 %v940
        %v1022 = vunpack.c.l.b16 %v941
        %v1023 = vunpack.c.l.b16 %v942
        %v1024 = vunpack.c.l.b16 %v943
        %v1025 = vunpack.c.l.b16 %v944
        %v1026 = vunpack.c.l.b16 %v945
        %v1027 = vunpack.c.l.b16 %v946
        %v1028 = vunpack.c.l.b16 %v947
        %v1029 = vpack.c.b16 %v998, %v997
        %v1030 = vpack.c.b16 %v1000, %v999
        %v1031 = vpack.c.b16 %v1002, %v1001
        %v1032 = vpack.c.b16 %v1004, %v1003
        %v1033 = vpack.c.b16 %v1006, %v1005
        %v1034 = vpack.c.b16 %v1008, %v1007
        %v1035 = vpack.c.b16 %v1010, %v1009
        %v1036 = vpack.c.b16 %v1012, %v1011
        %v1037 = vpack.c.b16 %v1014, %v1013
        %v1038 = vpack.c.b16 %v1016, %v1015
        %v1039 = vpack.c.b16 %v1018, %v1017
        %v1040 = vpack.c.b16 %v1020, %v1019
        %v1041 = vpack.c.b16 %v1022, %v1021
        %v1042 = vpack.c.b16 %v1024, %v1023
        %v1043 = vpack.c.b16 %v1026, %v1025
        %v1044 = vpack.c.b16 %v1028, %v1027
        %1061 = vmatprep.subr.bf16.mxu0 0
        %1062 = vmatpush1.bf16.msra.mxu0 %v1029
        %1063 = vmatprep.subr.bf16.mxu0 0
        %1064 = vmatpush1.bf16.msra.mxu0 %v1030
        %1065 = vmatprep.subr.bf16.mxu0 0
        %1066 = vmatpush1.bf16.msra.mxu0 %v1031
        %1067 = vmatprep.subr.bf16.mxu0 0
        %1068 = vmatpush1.bf16.msra.mxu0 %v1032
        %1069 = vmatprep.subr.bf16.mxu0 0
        %1070 = vmatpush1.bf16.msra.mxu0 %v1033
        %1071 = vmatprep.subr.bf16.mxu0 0
        %1072 = vmatpush1.bf16.msra.mxu0 %v1034
        %1073 = vmatprep.subr.bf16.mxu0 0
        %1074 = vmatpush1.bf16.msra.mxu0 %v1035
        %1075 = vmatprep.subr.bf16.mxu0 0
        %1076 = vmatpush1.bf16.msra.mxu0 %v1036
        %1077 = vmatprep.subr.bf16.mxu0 0
        %1078 = vmatpush1.bf16.msra.mxu0 %v1037
        %1079 = vmatprep.subr.bf16.mxu0 0
        %1080 = vmatpush1.bf16.msra.mxu0 %v1038
        %1081 = vmatprep.subr.bf16.mxu0 0
        %1082 = vmatpush1.bf16.msra.mxu0 %v1039
        %1083 = vmatprep.subr.bf16.mxu0 0
        %1084 = vmatpush1.bf16.msra.mxu0 %v1040
        %1085 = vmatprep.subr.bf16.mxu0 0
        %1086 = vmatpush1.bf16.msra.mxu0 %v1041
        %1087 = vmatprep.subr.bf16.mxu0 0
        %1088 = vmatpush1.bf16.msra.mxu0 %v1042
        %1089 = vmatprep.subr.bf16.mxu0 0
        %1090 = vmatpush1.bf16.msra.mxu0 %v1043
        %1091 = vmatprep.subr.bf16.mxu0 0
        %1092 = vmatpush1.bf16.msra.mxu0 %v1044
        %1093 = vmatprep.mubr.bf16.mxu0 %v962
        %1094 = vmatmul.mubr.bf16.gmra.mrb[0].mxu0 %v961
        %v1095 = vpop.f32.mrb[0].mxu0
        %v1096 = vadd.f32 %v953, %v1095
        %v1097 = vpop.f32.mrb[0].mxu0
        %v1098 = vpop.f32.mrb[0].mxu0
        %v1099 = vadd.f32 %v953, %v1098
        %v1100 = vpop.f32.mrb[0].mxu0
        %1101 = vdwg.mxu0
        %v1102 = vtanh.pop %v1096
        %v1103 = vtanh.pop %v1099
        %v1104 = vpack.c.bf16 %v1103, %v1102
        %v1105 = vld [vmem:[%s3] sm:$0xf]
        %v1106 = vld [vmem:[%s3 + $0x4] sm:$0xf]
        %v1107 = vld [vmem:[%s3 + $0x8] sm:$0xf]
        %v1108 = vld [vmem:[%s3 + $0xc] sm:$0xf]
        %v1109 = vld [vmem:[%s3 + $0x10] sm:$0xf]
        %v1110 = vld [vmem:[%s3 + $0x14] sm:$0xf]
        %v1111 = vld [vmem:[%s3 + $0x18] sm:$0xf]
        %v1112 = vld [vmem:[%s3 + $0x1c] sm:$0xf]
        %v1113 = vld [vmem:[%s3 + $0x20] sm:$0xf]
        %v1114 = vld [vmem:[%s3 + $0x24] sm:$0xf]
        %v1115 = vld [vmem:[%s3 + $0x28] sm:$0xf]
        %v1116 = vld [vmem:[%s3 + $0x2c] sm:$0xf]
        %v1117 = vld [vmem:[%s3 + $0x30] sm:$0xf]
        %v1118 = vld [vmem:[%s3 + $0x34] sm:$0xf]
        %v1119 = vld [vmem:[%s3 + $0x38] sm:$0xf]
        %v1120 = vld [vmem:[%s3 + $0x3c] sm:$0xf]
        %v1121 = vld [vmem:[#allocation5] sm:$0x1]
        %v1123 = vlaneseq
        %v1124 = vshrl.u32 %v1123, 7
        %v1125 = vsub.s32 0, %v1124
        %v1126 = vrot.slane %v1121, %v1125
        %v1144 = vunpack.c.l.b16 %v1105
        %v1145 = vunpack.c.l.b16 %v1106
        %v1146 = vunpack.c.l.b16 %v1107
        %v1147 = vunpack.c.l.b16 %v1108
        %v1148 = vunpack.c.l.b16 %v1109
        %v1149 = vunpack.c.l.b16 %v1110
        %v1150 = vunpack.c.l.b16 %v1111
        %v1151 = vunpack.c.l.b16 %v1112
        %v1152 = vunpack.c.l.b16 %v1113
        %v1153 = vunpack.c.l.b16 %v1114
        %v1154 = vunpack.c.l.b16 %v1115
        %v1155 = vunpack.c.l.b16 %v1116
        %v1156 = vunpack.c.l.b16 %v1117
        %v1157 = vunpack.c.l.b16 %v1118
        %v1158 = vunpack.c.l.b16 %v1119
        %v1159 = vunpack.c.l.b16 %v1120
        %v1160 = vpack.c.b16 %v1145, %v1144
        %v1161 = vpack.c.b16 %v1147, %v1146
        %v1162 = vpack.c.b16 %v1149, %v1148
        %v1163 = vpack.c.b16 %v1151, %v1150
        %v1164 = vpack.c.b16 %v1153, %v1152
        %v1165 = vpack.c.b16 %v1155, %v1154
        %v1166 = vpack.c.b16 %v1157, %v1156
        %v1167 = vpack.c.b16 %v1159, %v1158
        %1176 = vmatprep.subr.bf16.mxu0 0
        %1177 = vmatpush1.bf16.msra.mxu0 %v1160
        %1178 = vmatprep.subr.bf16.mxu0 0
        %1179 = vmatpush1.bf16.msra.mxu0 %v1161
        %1180 = vmatprep.subr.bf16.mxu0 0
        %1181 = vmatpush1.bf16.msra.mxu0 %v1162
        %1182 = vmatprep.subr.bf16.mxu0 0
        %1183 = vmatpush1.bf16.msra.mxu0 %v1163
        %1184 = vmatprep.subr.bf16.mxu0 0
        %1185 = vmatpush1.bf16.msra.mxu0 %v1164
        %1186 = vmatprep.subr.bf16.mxu0 0
        %1187 = vmatpush1.bf16.msra.mxu0 %v1165
        %1188 = vmatprep.subr.bf16.mxu0 0
        %1189 = vmatpush1.bf16.msra.mxu0 %v1166
        %1190 = vmatprep.subr.bf16.mxu0 0
        %1191 = vmatpush1.bf16.msra.mxu0 %v1167
        %1192 = vmatprep.subr.bf16.mxu0 0
        %1193 = vmatpush1.bf16.msra.mxu0 0
        %1194 = vmatprep.subr.bf16.mxu0 0
        %1195 = vmatpush1.bf16.msra.mxu0 0
        %1196 = vmatprep.subr.bf16.mxu0 0
        %1197 = vmatpush1.bf16.msra.mxu0 0
        %1198 = vmatprep.subr.bf16.mxu0 0
        %1199 = vmatpush1.bf16.msra.mxu0 0
        %1200 = vmatprep.subr.bf16.mxu0 0
        %1201 = vmatpush1.bf16.msra.mxu0 0
        %1202 = vmatprep.subr.bf16.mxu0 0
        %1203 = vmatpush1.bf16.msra.mxu0 0
        %1204 = vmatprep.subr.bf16.mxu0 0
        %1205 = vmatpush1.bf16.msra.mxu0 0
        %1206 = vmatprep.subr.bf16.mxu0 0
        %1207 = vmatpush1.bf16.msra.mxu0 0
        %1208 = vmatprep.mubr.bf16.mxu0 0
        %1209 = vmatmul.mubr.bf16.gmra.mrb[0].mxu0 %v1104
        %v1210 = vpop.f32.mrb[0].mxu0
        %v1211 = vadd.f32 %v1126, %v1210
        %v1212 = vpop.f32.mrb[0].mxu0
        %v1213 = vpop.f32.mrb[0].mxu0
        %v1214 = vadd.f32 %v1126, %v1213
        %v1215 = vpop.f32.mrb[0].mxu0
        %1216 = vdwg.mxu0
        %v1217 = vtanh.pop %v1211
        %v1218 = vtanh.pop %v1214
        %v1219 = vpack.c.bf16 %v1218, %v1217
        %v1220 = vld [vmem:[%s5] sm:$0xf]
        %v1221 = vld [vmem:[%s5 + $0x4] sm:$0xf]
        %v1222 = vld [vmem:[%s5 + $0x8] sm:$0xf]
        %v1223 = vld [vmem:[%s5 + $0xc] sm:$0xf]
        %v1224 = vld [vmem:[%s5 + $0x10] sm:$0xf]
        %v1225 = vld [vmem:[%s5 + $0x14] sm:$0xf]
        %v1226 = vld [vmem:[%s5 + $0x18] sm:$0xf]
        %v1227 = vld [vmem:[%s5 + $0x1c] sm:$0xf]
        %v1228 = vld [vmem:[#allocation7] sm:$0x1]
        %v1230 = vlaneseq
        %v1231 = vshrl.u32 %v1230, 7
        %v1232 = vsub.s32 0, %v1231
        %v1233 = vrot.slane %v1228, %v1232
        %v1243 = vunpack.c.l.b16 %v1220
        %v1244 = vunpack.c.l.b16 %v1221
        %v1245 = vunpack.c.l.b16 %v1222
        %v1246 = vunpack.c.l.b16 %v1223
        %v1247 = vunpack.c.l.b16 %v1224
        %v1248 = vunpack.c.l.b16 %v1225
        %v1249 = vunpack.c.l.b16 %v1226
        %v1250 = vunpack.c.l.b16 %v1227
        %v1251 = vpack.c.b16 %v1244, %v1243
        %v1252 = vpack.c.b16 %v1246, %v1245
        %v1253 = vpack.c.b16 %v1248, %v1247
        %v1254 = vpack.c.b16 %v1250, %v1249
        %vm1259 = vcmask 523264
        %v1261 = vsel %vm1259, %v1219, 0
        %1263 = vmatprep.subr.bf16.mxu0 0
        %1264 = vmatpush1.bf16.msra.mxu0 %v1251
        %1265 = vmatprep.subr.bf16.mxu0 0
        %1266 = vmatpush1.bf16.msra.mxu0 %v1252
        %1267 = vmatprep.subr.bf16.mxu0 0
        %1268 = vmatpush1.bf16.msra.mxu0 %v1253
        %1269 = vmatprep.subr.bf16.mxu0 0
        %1270 = vmatpush1.bf16.msra.mxu0 %v1254
        %1271 = vmatprep.subr.bf16.mxu0 0
        %1272 = vmatpush1.bf16.msra.mxu0 0
        %1273 = vmatprep.subr.bf16.mxu0 0
        %1274 = vmatpush1.bf16.msra.mxu0 0
        %1275 = vmatprep.subr.bf16.mxu0 0
        %1276 = vmatpush1.bf16.msra.mxu0 0
        %1277 = vmatprep.subr.bf16.mxu0 0
        %1278 = vmatpush1.bf16.msra.mxu0 0
        %1279 = vmatprep.subr.bf16.mxu0 0
        %1280 = vmatpush1.bf16.msra.mxu0 0
        %1281 = vmatprep.subr.bf16.mxu0 0
        %1282 = vmatpush1.bf16.msra.mxu0 0
        %1283 = vmatprep.subr.bf16.mxu0 0
        %1284 = vmatpush1.bf16.msra.mxu0 0
        %1285 = vmatprep.subr.bf16.mxu0 0
        %1286 = vmatpush1.bf16.msra.mxu0 0
        %1287 = vmatprep.subr.bf16.mxu0 0
        %1288 = vmatpush1.bf16.msra.mxu0 0
        %1289 = vmatprep.subr.bf16.mxu0 0
        %1290 = vmatpush1.bf16.msra.mxu0 0
        %1291 = vmatprep.subr.bf16.mxu0 0
        %1292 = vmatpush1.bf16.msra.mxu0 0
        %1293 = vmatprep.subr.bf16.mxu0 0
        %1294 = vmatpush1.bf16.msra.mxu0 0
        %1295 = vmatprep.mubr.bf16.mxu0 0
        %1296 = vmatmul.mubr.bf16.gmra.mrb[0].mxu0 %v1261
        %v1297 = vpop.f32.mrb[0].mxu0
        %v1298 = vadd.f32 %v1233, %v1297
        %v1299 = vpop.f32.mrb[0].mxu0
        %v1300 = vpop.f32.mrb[0].mxu0
        %v1301 = vadd.f32 %v1233, %v1300
        %v1302 = vpop.f32.mrb[0].mxu0
        %1303 = vdwg.mxu0
        %v1304 = vtanh.pop %v1298
        %v1305 = vtanh.pop %v1301
        %v1306 = vpack.c.bf16 %v1305, %v1304
        %v1307 = vld [vmem:[%s7] sm:$0xf]
        %v1308 = vld [vmem:[%s7 + $0x4] sm:$0xf]
        %v1309 = vld [vmem:[%s7 + $0x8] sm:$0xf]
        %v1310 = vld [vmem:[%s7 + $0xc] sm:$0xf]
        %v1311 = vld [vmem:[#allocation8] sm:$0x1]
        %v1313 = vlaneseq
        %v1314 = vshrl.u32 %v1313, 7
        %v1315 = vsub.s32 0, %v1314
        %v1316 = vrot.slane %v1311, %v1315
        %v1322 = vunpack.c.l.b16 %v1307
        %v1323 = vunpack.c.l.b16 %v1308
        %v1324 = vunpack.c.l.b16 %v1309
        %v1325 = vunpack.c.l.b16 %v1310
        %v1326 = vpack.c.b16 %v1323, %v1322
        %v1327 = vpack.c.b16 %v1325, %v1324
        %vm1330 = vcmask 261120
        %v1332 = vsel %vm1330, %v1306, 0
        %1334 = vmatprep.subr.bf16.mxu0 0
        %1335 = vmatpush1.bf16.msra.mxu0 %v1326
        %1336 = vmatprep.subr.bf16.mxu0 0
        %1337 = vmatpush1.bf16.msra.mxu0 %v1327
        %1338 = vmatprep.subr.bf16.mxu0 0
        %1339 = vmatpush1.bf16.msra.mxu0 0
        %1340 = vmatprep.subr.bf16.mxu0 0
        %1341 = vmatpush1.bf16.msra.mxu0 0
        %1342 = vmatprep.subr.bf16.mxu0 0
        %1343 = vmatpush1.bf16.msra.mxu0 0
        %1344 = vmatprep.subr.bf16.mxu0 0
        %1345 = vmatpush1.bf16.msra.mxu0 0
        %1346 = vmatprep.subr.bf16.mxu0 0
        %1347 = vmatpush1.bf16.msra.mxu0 0
        %1348 = vmatprep.subr.bf16.mxu0 0
        %1349 = vmatpush1.bf16.msra.mxu0 0
        %1350 = vmatprep.subr.bf16.mxu0 0
        %1351 = vmatpush1.bf16.msra.mxu0 0
        %1352 = vmatprep.subr.bf16.mxu0 0
        %1353 = vmatpush1.bf16.msra.mxu0 0
        %1354 = vmatprep.subr.bf16.mxu0 0
        %1355 = vmatpush1.bf16.msra.mxu0 0
        %1356 = vmatprep.subr.bf16.mxu0 0
        %1357 = vmatpush1.bf16.msra.mxu0 0
        %1358 = vmatprep.subr.bf16.mxu0 0
        %1359 = vmatpush1.bf16.msra.mxu0 0
        %1360 = vmatprep.subr.bf16.mxu0 0
        %1361 = vmatpush1.bf16.msra.mxu0 0
        %1362 = vmatprep.subr.bf16.mxu0 0
        %1363 = vmatpush1.bf16.msra.mxu0 0
        %1364 = vmatprep.subr.bf16.mxu0 0
        %1365 = vmatpush1.bf16.msra.mxu0 0
        %1366 = vmatprep.mubr.bf16.mxu0 0
        %1367 = vmatmul.mubr.bf16.gmra.mrb[0].mxu0 %v1332
        %v1368 = vpop.f32.mrb[0].mxu0
        %v1369 = vadd.f32 %v1316, %v1368
        %v1370 = vpop.f32.mrb[0].mxu0
        %v1371 = vpop.f32.mrb[0].mxu0
        %v1372 = vadd.f32 %v1316, %v1371
        %v1373 = vpop.f32.mrb[0].mxu0
        %1374 = vdwg.mxu0
        %v1375 = vtanh.pop %v1369
        %v1376 = vtanh.pop %v1372
        %v1377 = vpack.c.bf16 %v1376, %v1375
        %v1378 = vld [vmem:[%s9] sm:$0xf]
        %v1379 = vld [vmem:[%s9 + $0x4] sm:$0xf]
        %v1380 = vld [vmem:[#allocation10] sm:$0x1]
        %v1382 = vlaneseq
        %v1383 = vshrl.u32 %v1382, 7
        %v1384 = vsub.s32 0, %v1383
        %v1385 = vrot.slane %v1380, %v1384
        %v1389 = vunpack.c.l.b16 %v1378
        %v1390 = vunpack.c.l.b16 %v1379
        %v1391 = vpack.c.b16 %v1390, %v1389
        %vm1393 = vcmask 130048
        %v1395 = vsel %vm1393, %v1377, 0
        %1397 = vmatprep.subr.bf16.mxu0 0
        %1398 = vmatpush1.bf16.msra.mxu0 %v1391
        %1399 = vmatprep.subr.bf16.mxu0 0
        %1400 = vmatpush1.bf16.msra.mxu0 0
        %1401 = vmatprep.subr.bf16.mxu0 0
        %1402 = vmatpush1.bf16.msra.mxu0 0
        %1403 = vmatprep.subr.bf16.mxu0 0
        %1404 = vmatpush1.bf16.msra.mxu0 0
        %1405 = vmatprep.subr.bf16.mxu0 0
        %1406 = vmatpush1.bf16.msra.mxu0 0
        %1407 = vmatprep.subr.bf16.mxu0 0
        %1408 = vmatpush1.bf16.msra.mxu0 0
        %1409 = vmatprep.subr.bf16.mxu0 0
        %1410 = vmatpush1.bf16.msra.mxu0 0
        %1411 = vmatprep.subr.bf16.mxu0 0
        %1412 = vmatpush1.bf16.msra.mxu0 0
        %1413 = vmatprep.subr.bf16.mxu0 0
        %1414 = vmatpush1.bf16.msra.mxu0 0
        %1415 = vmatprep.subr.bf16.mxu0 0
        %1416 = vmatpush1.bf16.msra.mxu0 0
        %1417 = vmatprep.subr.bf16.mxu0 0
        %1418 = vmatpush1.bf16.msra.mxu0 0
        %1419 = vmatprep.subr.bf16.mxu0 0
        %1420 = vmatpush1.bf16.msra.mxu0 0
        %1421 = vmatprep.subr.bf16.mxu0 0
        %1422 = vmatpush1.bf16.msra.mxu0 0
        %1423 = vmatprep.subr.bf16.mxu0 0
        %1424 = vmatpush1.bf16.msra.mxu0 0
        %1425 = vmatprep.subr.bf16.mxu0 0
        %1426 = vmatpush1.bf16.msra.mxu0 0
        %1427 = vmatprep.subr.bf16.mxu0 0
        %1428 = vmatpush1.bf16.msra.mxu0 0
        %1429 = vmatprep.mubr.bf16.mxu0 0
        %1430 = vmatmul.mubr.bf16.gmra.mrb[0].mxu0 %v1395
        %v1431 = vpop.f32.mrb[0].mxu0
        %v1432 = vadd.f32 %v1385, %v1431
        %v1433 = vpop.f32.mrb[0].mxu0
        %v1434 = vpop.f32.mrb[0].mxu0
        %v1435 = vadd.f32 %v1385, %v1434
        %v1436 = vpop.f32.mrb[0].mxu0
        %1437 = vdwg.mxu0
        %v1438 = vtanh.pop %v1432
        %v1439 = vtanh.pop %v1435
        %v1440 = vpack.c.bf16 %v1439, %v1438
        %v1441 = vld [vmem:[#allocation11] sm:$0xf]
        %v1442 = vld [vmem:[#allocation13] sm:$0x1]
        %v1444 = vlaneseq
        %v1445 = vshrl.u32 %v1444, 7
        %v1446 = vsub.s32 0, %v1445
        %v1447 = vrot.slane %v1442, %v1446
        %vm1449 = vcmask 64512
        %v1451 = vsel %vm1449, %v1440, 0
        %vm1453 = vcmask 1043456
        %v1455 = vsel %vm1453, %v1441, 0
        %1457 = vmatprep.subr.bf16.mxu0 0
        %1458 = vmatpush1.bf16.msra.mxu0 %v1455
        %1459 = vmatprep.subr.bf16.mxu0 0
        %1460 = vmatpush1.bf16.msra.mxu0 0
        %1461 = vmatprep.subr.bf16.mxu0 0
        %1462 = vmatpush1.bf16.msra.mxu0 0
        %1463 = vmatprep.subr.bf16.mxu0 0
        %1464 = vmatpush1.bf16.msra.mxu0 0
        %1465 = vmatprep.subr.bf16.mxu0 0
        %1466 = vmatpush1.bf16.msra.mxu0 0
        %1467 = vmatprep.subr.bf16.mxu0 0
        %1468 = vmatpush1.bf16.msra.mxu0 0
        %1469 = vmatprep.subr.bf16.mxu0 0
        %1470 = vmatpush1.bf16.msra.mxu0 0
        %1471 = vmatprep.subr.bf16.mxu0 0
        %1472 = vmatpush1.bf16.msra.mxu0 0
        %1473 = vmatprep.subr.bf16.mxu0 0
        %1474 = vmatpush1.bf16.msra.mxu0 0
        %1475 = vmatprep.subr.bf16.mxu0 0
        %1476 = vmatpush1.bf16.msra.mxu0 0
        %1477 = vmatprep.subr.bf16.mxu0 0
        %1478 = vmatpush1.bf16.msra.mxu0 0
        %1479 = vmatprep.subr.bf16.mxu0 0
        %1480 = vmatpush1.bf16.msra.mxu0 0
        %1481 = vmatprep.subr.bf16.mxu0 0
        %1482 = vmatpush1.bf16.msra.mxu0 0
        %1483 = vmatprep.subr.bf16.mxu0 0
        %1484 = vmatpush1.bf16.msra.mxu0 0
        %1485 = vmatprep.subr.bf16.mxu0 0
        %1486 = vmatpush1.bf16.msra.mxu0 0
        %1487 = vmatprep.subr.bf16.mxu0 0
        %1488 = vmatpush1.bf16.msra.mxu0 0
        %1489 = vmatprep.mubr.bf16.mxu0 0
        %1490 = vmatmul.mubr.bf16.gmra.mrb[0].mxu0 %v1451
        %v1491 = vpop.f32.mrb[0].mxu0
        %v1492 = vadd.f32 %v1447, %v1491
        %v1493 = vpop.f32.mrb[0].mxu0
        %v1494 = vpop.f32.mrb[0].mxu0
        %v1495 = vadd.f32 %v1447, %v1494
        %v1496 = vpop.f32.mrb[0].mxu0
        %1497 = vdwg.mxu0
        %v1498 = vtanh.pop %v1492
        %v1499 = vtanh.pop %v1495
        %v1500 = vpack.c.bf16 %v1499, %v1498
        %v1501 = vld [vmem:[#allocation14] sm:$0xf]
        %v1502 = vld [vmem:[#allocation16] sm:$0x1]
        %v1504 = vlaneseq
        %v1505 = vshrl.u32 %v1504, 7
        %v1506 = vsub.s32 0, %v1505
        %v1507 = vrot.slane %v1502, %v1506
        %v1510 = vsel %vm1449, %v1500, 0
        %v1513 = vsel %vm1453, %v1501, 0
        %1515 = vmatprep.subr.bf16.mxu0 0
        %1516 = vmatpush1.bf16.msra.mxu0 %v1513
        %1517 = vmatprep.subr.bf16.mxu0 0
        %1518 = vmatpush1.bf16.msra.mxu0 0
        %1519 = vmatprep.subr.bf16.mxu0 0
        %1520 = vmatpush1.bf16.msra.mxu0 0
        %1521 = vmatprep.subr.bf16.mxu0 0
        %1522 = vmatpush1.bf16.msra.mxu0 0
        %1523 = vmatprep.subr.bf16.mxu0 0
        %1524 = vmatpush1.bf16.msra.mxu0 0
        %1525 = vmatprep.subr.bf16.mxu0 0
        %1526 = vmatpush1.bf16.msra.mxu0 0
        %1527 = vmatprep.subr.bf16.mxu0 0
        %1528 = vmatpush1.bf16.msra.mxu0 0
        %1529 = vmatprep.subr.bf16.mxu0 0
        %1530 = vmatpush1.bf16.msra.mxu0 0
        %1531 = vmatprep.subr.bf16.mxu0 0
        %1532 = vmatpush1.bf16.msra.mxu0 0
        %1533 = vmatprep.subr.bf16.mxu0 0
        %1534 = vmatpush1.bf16.msra.mxu0 0
        %1535 = vmatprep.subr.bf16.mxu0 0
        %1536 = vmatpush1.bf16.msra.mxu0 0
        %1537 = vmatprep.subr.bf16.mxu0 0
        %1538 = vmatpush1.bf16.msra.mxu0 0
        %1539 = vmatprep.subr.bf16.mxu0 0
        %1540 = vmatpush1.bf16.msra.mxu0 0
        %1541 = vmatprep.subr.bf16.mxu0 0
        %1542 = vmatpush1.bf16.msra.mxu0 0
        %1543 = vmatprep.subr.bf16.mxu0 0
        %1544 = vmatpush1.bf16.msra.mxu0 0
        %1545 = vmatprep.subr.bf16.mxu0 0
        %1546 = vmatpush1.bf16.msra.mxu0 0
        %1547 = vmatprep.mubr.bf16.mxu0 0
        %1548 = vmatmul.mubr.bf16.gmra.mrb[0].mxu0 %v1510
        %v1549 = vpop.f32.mrb[0].mxu0
        %v1550 = vadd.f32 %v1507, %v1549
        %v1551 = vpop.f32.mrb[0].mxu0
        %v1552 = vpop.f32.mrb[0].mxu0
        %v1553 = vadd.f32 %v1507, %v1552
        %v1554 = vpop.f32.mrb[0].mxu0
        %1555 = vdwg.mxu0
        %v1556 = vtanh.pop %v1550
        %v1557 = vtanh.pop %v1553
        %v1558 = vpack.c.bf16 %v1557, %v1556
        %v1559 = vld [vmem:[#allocation17] sm:$0xf]
        %v1560 = vld [vmem:[#allocation17 + $0x4] sm:$0xf]
        %v1561 = vld [vmem:[#allocation19] sm:$0x1]
        %v1563 = vlaneseq
        %v1564 = vshrl.u32 %v1563, 7
        %v1565 = vsub.s32 0, %v1564
        %v1566 = vrot.slane %v1561, %v1565
        %v1570 = vunpack.c.l.b16 %v1559
        %v1571 = vunpack.c.l.b16 %v1560
        %v1572 = vpack.c.b16 %v1571, %v1570
        %v1575 = vsel %vm1393, %v1558, 0
        %1577 = vmatprep.subr.bf16.mxu0 0
        %1578 = vmatpush1.bf16.msra.mxu0 %v1572
        %1579 = vmatprep.subr.bf16.mxu0 0
        %1580 = vmatpush1.bf16.msra.mxu0 0
        %1581 = vmatprep.subr.bf16.mxu0 0
        %1582 = vmatpush1.bf16.msra.mxu0 0
        %1583 = vmatprep.subr.bf16.mxu0 0
        %1584 = vmatpush1.bf16.msra.mxu0 0
        %1585 = vmatprep.subr.bf16.mxu0 0
        %1586 = vmatpush1.bf16.msra.mxu0 0
        %1587 = vmatprep.subr.bf16.mxu0 0
        %1588 = vmatpush1.bf16.msra.mxu0 0
        %1589 = vmatprep.subr.bf16.mxu0 0
        %1590 = vmatpush1.bf16.msra.mxu0 0
        %1591 = vmatprep.subr.bf16.mxu0 0
        %1592 = vmatpush1.bf16.msra.mxu0 0
        %1593 = vmatprep.subr.bf16.mxu0 0
        %1594 = vmatpush1.bf16.msra.mxu0 0
        %1595 = vmatprep.subr.bf16.mxu0 0
        %1596 = vmatpush1.bf16.msra.mxu0 0
        %1597 = vmatprep.subr.bf16.mxu0 0
        %1598 = vmatpush1.bf16.msra.mxu0 0
        %1599 = vmatprep.subr.bf16.mxu0 0
        %1600 = vmatpush1.bf16.msra.mxu0 0
        %1601 = vmatprep.subr.bf16.mxu0 0
        %1602 = vmatpush1.bf16.msra.mxu0 0
        %1603 = vmatprep.subr.bf16.mxu0 0
        %1604 = vmatpush1.bf16.msra.mxu0 0
        %1605 = vmatprep.subr.bf16.mxu0 0
        %1606 = vmatpush1.bf16.msra.mxu0 0
        %1607 = vmatprep.subr.bf16.mxu0 0
        %1608 = vmatpush1.bf16.msra.mxu0 0
        %1609 = vmatprep.mubr.bf16.mxu0 0
        %1610 = vmatmul.mubr.bf16.gmra.mrb[0].mxu0 %v1575
        %v1611 = vpop.f32.mrb[0].mxu0
        %v1612 = vadd.f32 %v1566, %v1611
        %v1613 = vpop.f32.mrb[0].mxu0
        %v1614 = vpop.f32.mrb[0].mxu0
        %v1615 = vadd.f32 %v1566, %v1614
        %v1616 = vpop.f32.mrb[0].mxu0
        %1617 = vdwg.mxu0
        %v1618 = vtanh.pop %v1612
        %v1619 = vtanh.pop %v1615
        %v1620 = vpack.c.bf16 %v1619, %v1618
        %v1621 = vld [vmem:[#allocation20] sm:$0xf]
        %v1622 = vld [vmem:[#allocation20 + $0x4] sm:$0xf]
        %v1623 = vld [vmem:[#allocation20 + $0x8] sm:$0xf]
        %v1624 = vld [vmem:[#allocation20 + $0xc] sm:$0xf]
        %v1625 = vld [vmem:[#allocation22] sm:$0x1]
        %v1627 = vlaneseq
        %v1628 = vshrl.u32 %v1627, 7
        %v1629 = vsub.s32 0, %v1628
        %v1630 = vrot.slane %v1625, %v1629
        %v1636 = vunpack.c.l.b16 %v1621
        %v1637 = vunpack.c.l.b16 %v1622
        %v1638 = vunpack.c.l.b16 %v1623
        %v1639 = vunpack.c.l.b16 %v1624
        %v1640 = vpack.c.b16 %v1637, %v1636
        %v1641 = vpack.c.b16 %v1639, %v1638
        %v1645 = vsel %vm1330, %v1620, 0
        %1647 = vmatprep.subr.bf16.mxu0 0
        %1648 = vmatpush1.bf16.msra.mxu0 %v1640
        %1649 = vmatprep.subr.bf16.mxu0 0
        %1650 = vmatpush1.bf16.msra.mxu0 %v1641
        %1651 = vmatprep.subr.bf16.mxu0 0
        %1652 = vmatpush1.bf16.msra.mxu0 0
        %1653 = vmatprep.subr.bf16.mxu0 0
        %1654 = vmatpush1.bf16.msra.mxu0 0
        %1655 = vmatprep.subr.bf16.mxu0 0
        %1656 = vmatpush1.bf16.msra.mxu0 0
        %1657 = vmatprep.subr.bf16.mxu0 0
        %1658 = vmatpush1.bf16.msra.mxu0 0
        %1659 = vmatprep.subr.bf16.mxu0 0
        %1660 = vmatpush1.bf16.msra.mxu0 0
        %1661 = vmatprep.subr.bf16.mxu0 0
        %1662 = vmatpush1.bf16.msra.mxu0 0
        %1663 = vmatprep.subr.bf16.mxu0 0
        %1664 = vmatpush1.bf16.msra.mxu0 0
        %1665 = vmatprep.subr.bf16.mxu0 0
        %1666 = vmatpush1.bf16.msra.mxu0 0
        %1667 = vmatprep.subr.bf16.mxu0 0
        %1668 = vmatpush1.bf16.msra.mxu0 0
        %1669 = vmatprep.subr.bf16.mxu0 0
        %1670 = vmatpush1.bf16.msra.mxu0 0
        %1671 = vmatprep.subr.bf16.mxu0 0
        %1672 = vmatpush1.bf16.msra.mxu0 0
        %1673 = vmatprep.subr.bf16.mxu0 0
        %1674 = vmatpush1.bf16.msra.mxu0 0
        %1675 = vmatprep.subr.bf16.mxu0 0
        %1676 = vmatpush1.bf16.msra.mxu0 0
        %1677 = vmatprep.subr.bf16.mxu0 0
        %1678 = vmatpush1.bf16.msra.mxu0 0
        %1679 = vmatprep.mubr.bf16.mxu0 0
        %1680 = vmatmul.mubr.bf16.gmra.mrb[0].mxu0 %v1645
        %v1681 = vpop.f32.mrb[0].mxu0
        %v1682 = vadd.f32 %v1630, %v1681
        %v1683 = vpop.f32.mrb[0].mxu0
        %v1684 = vpop.f32.mrb[0].mxu0
        %v1685 = vadd.f32 %v1630, %v1684
        %v1686 = vpop.f32.mrb[0].mxu0
        %1687 = vdwg.mxu0
        %v1688 = vtanh.pop %v1682
        %v1689 = vtanh.pop %v1685
        %v1690 = vpack.c.bf16 %v1689, %v1688
        %v1691 = vld [vmem:[#allocation23] sm:$0xf]
        %v1692 = vld [vmem:[#allocation23 + $0x4] sm:$0xf]
        %v1693 = vld [vmem:[#allocation23 + $0x8] sm:$0xf]
        %v1694 = vld [vmem:[#allocation23 + $0xc] sm:$0xf]
        %v1695 = vld [vmem:[#allocation23 + $0x10] sm:$0xf]
        %v1696 = vld [vmem:[#allocation23 + $0x14] sm:$0xf]
        %v1697 = vld [vmem:[#allocation23 + $0x18] sm:$0xf]
        %v1698 = vld [vmem:[#allocation23 + $0x1c] sm:$0xf]
        %v1699 = vld [vmem:[#allocation25] sm:$0x1]
        %v1701 = vlaneseq
        %v1702 = vshrl.u32 %v1701, 7
        %v1703 = vsub.s32 0, %v1702
        %v1704 = vrot.slane %v1699, %v1703
        %v1714 = vunpack.c.l.b16 %v1691
        %v1715 = vunpack.c.l.b16 %v1692
        %v1716 = vunpack.c.l.b16 %v1693
        %v1717 = vunpack.c.l.b16 %v1694
        %v1718 = vunpack.c.l.b16 %v1695
        %v1719 = vunpack.c.l.b16 %v1696
        %v1720 = vunpack.c.l.b16 %v1697
        %v1721 = vunpack.c.l.b16 %v1698
        %v1722 = vpack.c.b16 %v1715, %v1714
        %v1723 = vpack.c.b16 %v1717, %v1716
        %v1724 = vpack.c.b16 %v1719, %v1718
        %v1725 = vpack.c.b16 %v1721, %v1720
        %v1731 = vsel %vm1259, %v1690, 0
        %1733 = vmatprep.subr.bf16.mxu0 0
        %1734 = vmatpush1.bf16.msra.mxu0 %v1722
        %1735 = vmatprep.subr.bf16.mxu0 0
        %1736 = vmatpush1.bf16.msra.mxu0 %v1723
        %1737 = vmatprep.subr.bf16.mxu0 0
        %1738 = vmatpush1.bf16.msra.mxu0 %v1724
        %1739 = vmatprep.subr.bf16.mxu0 0
        %1740 = vmatpush1.bf16.msra.mxu0 %v1725
        %1741 = vmatprep.subr.bf16.mxu0 0
        %1742 = vmatpush1.bf16.msra.mxu0 0
        %1743 = vmatprep.subr.bf16.mxu0 0
        %1744 = vmatpush1.bf16.msra.mxu0 0
        %1745 = vmatprep.subr.bf16.mxu0 0
        %1746 = vmatpush1.bf16.msra.mxu0 0
        %1747 = vmatprep.subr.bf16.mxu0 0
        %1748 = vmatpush1.bf16.msra.mxu0 0
        %1749 = vmatprep.subr.bf16.mxu0 0
        %1750 = vmatpush1.bf16.msra.mxu0 0
        %1751 = vmatprep.subr.bf16.mxu0 0
        %1752 = vmatpush1.bf16.msra.mxu0 0
        %1753 = vmatprep.subr.bf16.mxu0 0
        %1754 = vmatpush1.bf16.msra.mxu0 0
        %1755 = vmatprep.subr.bf16.mxu0 0
        %1756 = vmatpush1.bf16.msra.mxu0 0
        %1757 = vmatprep.subr.bf16.mxu0 0
        %1758 = vmatpush1.bf16.msra.mxu0 0
        %1759 = vmatprep.subr.bf16.mxu0 0
        %1760 = vmatpush1.bf16.msra.mxu0 0
        %1761 = vmatprep.subr.bf16.mxu0 0
        %1762 = vmatpush1.bf16.msra.mxu0 0
        %1763 = vmatprep.subr.bf16.mxu0 0
        %1764 = vmatpush1.bf16.msra.mxu0 0
        %1765 = vmatprep.mubr.bf16.mxu0 0
        %1766 = vmatmul.mubr.bf16.gmra.mrb[0].mxu0 %v1731
        %v1767 = vpop.f32.mrb[0].mxu0
        %v1768 = vadd.f32 %v1704, %v1767
        %v1769 = vpop.f32.mrb[0].mxu0
        %v1770 = vpop.f32.mrb[0].mxu0
        %v1771 = vadd.f32 %v1704, %v1770
        %v1772 = vpop.f32.mrb[0].mxu0
        %1773 = vdwg.mxu0
        %v1774 = vtanh.pop %v1768
        %v1775 = vtanh.pop %v1771
        %v1776 = vpack.c.bf16 %v1775, %v1774
        %v1777 = vld [vmem:[%s21] sm:$0xff]
        %v1778 = vld [vmem:[%s21 + $0x8] sm:$0xff]
        %v1779 = vld [vmem:[%s21 + $0x10] sm:$0xff]
        %v1780 = vld [vmem:[%s21 + $0x18] sm:$0xff]
        %v1781 = vld [vmem:[%s21 + $0x20] sm:$0xff]
        %v1782 = vld [vmem:[%s21 + $0x28] sm:$0xff]
        %v1783 = vld [vmem:[%s21 + $0x30] sm:$0xff]
        %v1784 = vld [vmem:[%s21 + $0x38] sm:$0xff]
        %v1785 = vld [vmem:[%s21 + $0x40] sm:$0xff]
        %v1786 = vld [vmem:[%s21 + $0x48] sm:$0xff]
        %v1787 = vld [vmem:[%s21 + $0x50] sm:$0xff]
        %v1788 = vld [vmem:[%s21 + $0x58] sm:$0xff]
        %v1789 = vld [vmem:[%s21 + $0x60] sm:$0xff]
        %v1790 = vld [vmem:[%s21 + $0x68] sm:$0xff]
        %v1791 = vld [vmem:[%s21 + $0x70] sm:$0xff]
        %v1792 = vld [vmem:[%s21 + $0x78] sm:$0xff]
        %v1793 = vld [vmem:[%s22] sm:$0x3]
        %v1795 = vlaneseq
        %v1796 = vshrl.u32 %v1795, 7
        %v1797 = vsub.s32 0, %v1796
        %v1798 = vrot.slane %v1793, %v1797
        %v1799 = vlaneseq
        %v1800 = vshrl.u32 %v1799, 7
        %v1801 = vsub.s32 1, %v1800
        %v1802 = vrot.slane %v1793, %v1801
        %v1821 = vunpack.c.l.b16 %v1777
        %v1822 = vunpack.c.h.b16 %v1777
        %v1823 = vunpack.c.l.b16 %v1778
        %v1824 = vunpack.c.h.b16 %v1778
        %v1825 = vunpack.c.l.b16 %v1779
        %v1826 = vunpack.c.h.b16 %v1779
        %v1827 = vunpack.c.l.b16 %v1780
        %v1828 = vunpack.c.h.b16 %v1780
        %v1829 = vunpack.c.l.b16 %v1781
        %v1830 = vunpack.c.h.b16 %v1781
        %v1831 = vunpack.c.l.b16 %v1782
        %v1832 = vunpack.c.h.b16 %v1782
        %v1833 = vunpack.c.l.b16 %v1783
        %v1834 = vunpack.c.h.b16 %v1783
        %v1835 = vunpack.c.l.b16 %v1784
        %v1836 = vunpack.c.h.b16 %v1784
        %v1837 = vunpack.c.l.b16 %v1785
        %v1838 = vunpack.c.h.b16 %v1785
        %v1839 = vunpack.c.l.b16 %v1786
        %v1840 = vunpack.c.h.b16 %v1786
        %v1841 = vunpack.c.l.b16 %v1787
        %v1842 = vunpack.c.h.b16 %v1787
        %v1843 = vunpack.c.l.b16 %v1788
        %v1844 = vunpack.c.h.b16 %v1788
        %v1845 = vunpack.c.l.b16 %v1789
        %v1846 = vunpack.c.h.b16 %v1789
        %v1847 = vunpack.c.l.b16 %v1790
        %v1848 = vunpack.c.h.b16 %v1790
        %v1849 = vunpack.c.l.b16 %v1791
        %v1850 = vunpack.c.h.b16 %v1791
        %v1851 = vunpack.c.l.b16 %v1792
        %v1852 = vunpack.c.h.b16 %v1792
        %v1853 = vpack.c.b16 %v1823, %v1821
        %v1854 = vpack.c.b16 %v1824, %v1822
        %v1855 = vpack.c.b16 %v1827, %v1825
        %v1856 = vpack.c.b16 %v1828, %v1826
        %v1857 = vpack.c.b16 %v1831, %v1829
        %v1858 = vpack.c.b16 %v1832, %v1830
        %v1859 = vpack.c.b16 %v1835, %v1833
        %v1860 = vpack.c.b16 %v1836, %v1834
        %v1861 = vpack.c.b16 %v1839, %v1837
        %v1862 = vpack.c.b16 %v1840, %v1838
        %v1863 = vpack.c.b16 %v1843, %v1841
        %v1864 = vpack.c.b16 %v1844, %v1842
        %v1865 = vpack.c.b16 %v1847, %v1845
        %v1866 = vpack.c.b16 %v1848, %v1846
        %v1867 = vpack.c.b16 %v1851, %v1849
        %v1868 = vpack.c.b16 %v1852, %v1850
        %1885 = vmatprep.subr.bf16.mxu0 %v1854
        %1886 = vmatpush1.bf16.msra.mxu0 %v1853
        %1887 = vmatprep.subr.bf16.mxu0 %v1856
        %1888 = vmatpush1.bf16.msra.mxu0 %v1855
        %1889 = vmatprep.subr.bf16.mxu0 %v1858
        %1890 = vmatpush1.bf16.msra.mxu0 %v1857
        %1891 = vmatprep.subr.bf16.mxu0 %v1860
        %1892 = vmatpush1.bf16.msra.mxu0 %v1859
        %1893 = vmatprep.subr.bf16.mxu0 %v1862
        %1894 = vmatpush1.bf16.msra.mxu0 %v1861
        %1895 = vmatprep.subr.bf16.mxu0 %v1864
        %1896 = vmatpush1.bf16.msra.mxu0 %v1863
        %1897 = vmatprep.subr.bf16.mxu0 %v1866
        %1898 = vmatpush1.bf16.msra.mxu0 %v1865
        %1899 = vmatprep.subr.bf16.mxu0 %v1868
        %1900 = vmatpush1.bf16.msra.mxu0 %v1867
        %1901 = vmatprep.subr.bf16.mxu0 0
        %1902 = vmatpush1.bf16.msra.mxu0 0
        %1903 = vmatprep.subr.bf16.mxu0 0
        %1904 = vmatpush1.bf16.msra.mxu0 0
        %1905 = vmatprep.subr.bf16.mxu0 0
        %1906 = vmatpush1.bf16.msra.mxu0 0
        %1907 = vmatprep.subr.bf16.mxu0 0
        %1908 = vmatpush1.bf16.msra.mxu0 0
        %1909 = vmatprep.subr.bf16.mxu0 0
        %1910 = vmatpush1.bf16.msra.mxu0 0
        %1911 = vmatprep.subr.bf16.mxu0 0
        %1912 = vmatpush1.bf16.msra.mxu0 0
        %1913 = vmatprep.subr.bf16.mxu0 0
        %1914 = vmatpush1.bf16.msra.mxu0 0
        %1915 = vmatprep.subr.bf16.mxu0 0
        %1916 = vmatpush1.bf16.msra.mxu0 0
        %1917 = vmatprep.mubr.bf16.mxu0 0
        %1918 = vmatmul.mubr.bf16.gmra.mrb[0].mxu0 %v1776
        %v1919 = vpop.f32.mrb[0].mxu0
        %v1920 = vadd.f32 %v1798, %v1919
        %v1921 = vpop.f32.mrb[0].mxu0
        %v1922 = vadd.f32 %v1802, %v1921
        %v1923 = vpop.f32.mrb[0].mxu0
        %v1924 = vadd.f32 %v1798, %v1923
        %v1925 = vpop.f32.mrb[0].mxu0
        %v1926 = vadd.f32 %v1802, %v1925
        %1927 = vdwg.mxu0
        %1928 = vst [vmem:[%s910] sm:$0xff] %v1920
        %1929 = vst [vmem:[%s910 + $0x8] sm:$0xff] %v1922
        %1930 = vst [vmem:[%s910 + $0x10] sm:$0xff] %v1924
        %1931 = vst [vmem:[%s910 + $0x18] sm:$0xff] %v1926
        %s1932 = sand.u32 %s543, 1
        %s1933 = scalar_lea.sflag [#allocation4], %s1932
        %s1934 = sand.u32 %s543, 1
        %s1935 = smul.addr %s1934, 32
        %s1936 = scalar_lea.vmem [#allocation26], %s1935
        // Predicated region
        $region173: #{tpu_custom_call.1} parent=111 // pred_check
          %p1937 = pneg %p553
        $region174: #{tpu_custom_call.1} parent=111 // pred_check_branch
          %1939 = sbr.rel (%p1937) target = $region176
        $region175: #{tpu_custom_call.1} parent=111 // pred_region
          %s1940 = smul.u32 2, %s47
          %s1942 = ssub.s32 512, 512
          %1943 = vsyncadd %s1933, %s1942
          %s1944 = smul.addr %s1940, 2
          %s1945 = smul.addr %s1944, 128
          %s1946 = scalar_lea.hbm %s23, %s1945
          %s1947 = sshll.u32 %s1936, 4
          %s1948 = int_to_ptr.vmem [resolvable:$true] %s1947
          %1953 = dma.vmem_to_hbm [thread:$0]  %s1948, 512, %s1946, %s1933, 256, 256, 16
        $region176: #{tpu_custom_call.1} parent=111 // pred_fallthru
          _
      $region112: #{tpu_custom_call.1} parent=5 // pred_fallthru
        _
      %p1954 = scmp.le.s32.totalorder 2, %s42
      // Predicated region
      $region177: #{tpu_custom_call.1} parent=5 // pred_check
        %p1955 = pneg %p1954
      $region178: #{tpu_custom_call.1} parent=5 // pred_check_branch
        %1957 = sbr.rel (%p1955) target = $region180
      $region179: #{tpu_custom_call.1} parent=5 // pred_region
        %s1958 = ssub.s32 %s42, 2
        // Predicated region
        $region181: #{tpu_custom_call.1} parent=179 // pred_check
          %p1959 = pneg %p559
        $region182: #{tpu_custom_call.1} parent=179 // pred_check_branch
          %1961 = sbr.rel (%p1959) target = $region184
        $region183: #{tpu_custom_call.1} parent=179 // pred_region
          %s1962 = sand.u32 %s544, 1
          %s1963 = scalar_lea.sflag [#allocation4], %s1962
          %s1964 = sand.u32 %s544, 1
          %s1965 = smul.addr %s1964, 32
          %s1966 = scalar_lea.vmem [#allocation26], %s1965
          %1967 = dma.done %s1963, 512
        $region184: #{tpu_custom_call.1} parent=179 // pred_fallthru
          _
      $region180: #{tpu_custom_call.1} parent=5 // pred_fallthru
        _
    $region6: #{tpu_custom_call.1} parent=1 // loop_footer
      %s46 = sadd.s32 1, %s42
    $region7: #{tpu_custom_call.1} parent=1 // loop_footer_branch
      %41 = sbr.rel target = $region3
    $region8: #{tpu_custom_call.1} parent=1 // loop_exit
      _
    %1968 = vsyncpa [#allocation3], 1
    %s1969 = scalar_lea.sflag [#allocation3], 1
    %1970 = vsyncpa %s1969, 1
    %1971 = vsyncpa [#allocation6], 1
    %1972 = vsyncpa [#allocation9], 1
    %1973 = vsyncpa [#allocation12], 1
    %1974 = vsyncpa [#allocation15], 1
    %1975 = vsyncpa [#allocation18], 1
    %1976 = vsyncpa [#allocation21], 1
    %1977 = vsyncpa [#allocation24], 1
    %1978 = vsyncpa [#allocation4], 1
    %s1979 = scalar_lea.sflag [#allocation4], 1
    %1980 = vsyncpa %s1979, 1

</llo_original>
